<compile_context>
chip_gen: v5e
topology: v5e:2x2
jax: 0.10.0
libtpu: 0.0.40
codegen_flags: <defaults>
</compile_context>

<pallas_src>
import functools

import jax
import jax.numpy as jnp
from jax.experimental import pallas as pl
from jax.experimental.pallas import tpu as pltpu


# ----------------------------------------------------------------------------- utils
def _normalize(v, axis=-1, eps=1e-8):
    return v / (jnp.linalg.norm(v, axis=axis, keepdims=True) + eps)


def _elu(x):
    # overflow-safe ELU: exp only sees non-positive arguments
    return jnp.where(x > 0, x, jnp.exp(jnp.minimum(x, 0.0)) - 1.0)


# ----------------------------------------------------------------------------- Pallas kernels
def _local_features_kernel(x_ref, w1_ref, b1_ref, w2_ref, b2_ref, pw_ref, pb_ref,
                           o_ref, npad_ref):
    """Fused LocalFeatures + encoder preprocessor for one subgraph (batch element).

    x_ref : [1, L, 18]  bf16  im2col columns of the padded 6-channel input (k-major)
    w1_ref: [18, C]     bf16  Conv1d(6->C, k=3) weight, flattened k-major
    w2_ref: [3, C, C]   bf16  Conv1d(C->C, k=3, dilation=2) weight (per-tap)
    pw_ref: [C, C]      bf16  encoder preprocessor Linear weight
    biases f32 [1, C];  o_ref: [1, L, C] f32;  npad_ref: VMEM f32 [L+4, C]
    """
    L = o_ref.shape[1]

    # Conv1d(6->C, k=3, pad=1) as a single im2col matmul, then ELU.
    y = _elu(jnp.dot(x_ref[0], w1_ref[...], preferred_element_type=jnp.float32)
             + b1_ref[...])                                   # [L, C] f32

    # InstanceNorm1d (affine=False, biased variance, eps=1e-5) over the sequence axis.
    mu = jnp.mean(y, axis=0, keepdims=True)
    var = jnp.mean((y - mu) ** 2, axis=0, keepdims=True)
    normed = (y - mu) * jax.lax.rsqrt(var + 1e-5)

    # Dilated Conv1d(C->C, k=3, dilation=2, pad=2): zero-pad `normed` inside VMEM scratch,
    # then three shifted taps (no HBM round-trip between the two conv stages).
    npad_ref[...] = jnp.zeros_like(npad_ref)
    npad_ref[2:L + 2, :] = normed
    acc = jnp.dot(npad_ref[0:L, :].astype(jnp.bfloat16), w2_ref[0],
                  preferred_element_type=jnp.float32)
    acc = acc + jnp.dot(npad_ref[2:L + 2, :].astype(jnp.bfloat16), w2_ref[1],
                        preferred_element_type=jnp.float32)
    acc = acc + jnp.dot(npad_ref[4:L + 4, :].astype(jnp.bfloat16), w2_ref[2],
                        preferred_element_type=jnp.float32)
    out = _elu(acc + b2_ref[...] + y)                         # elu(block(bn(out)) + out)

    # Fused StructuredTransformerEncoder.preprocessor Linear(size, size).
    o_ref[0] = (jnp.dot(out.astype(jnp.bfloat16), pw_ref[...],
                        preferred_element_type=jnp.float32) + pb_ref[...])


def _encoder_block_kernel(g_ref, r_ref, h_ref, p_ref, wh_ref, wr_ref, ab_ref,
                          w1_ref, b1_ref, w2_ref, b2_ref, w3_ref, b3_ref, o_ref):
    """One fused StructuredTransformerEncoderBlock (pre_norm, batch_norm=False, eval dropout).

    g_ref: [TM*K, S] bf16 gathered neighbour features   r_ref: [TM*K, Dp] bf16 relative feats
    h_ref: [TM, S]   f32  residual stream               p_ref: [TM, TM*K] bf16 mean-pool matrix
    weights bf16, biases f32 [1, ·];  o_ref: [TM, S] f32
    """
    # NeighbourLinear with the weight split into W_h / W_rel (no concat intermediate), ReLU.
    y = jnp.dot(g_ref[...], wh_ref[...], preferred_element_type=jnp.float32)
    y = y + jnp.dot(r_ref[...], wr_ref[...], preferred_element_type=jnp.float32)
    y = jnp.maximum(y + ab_ref[...], 0.0)                     # [TM*K, S]
    # TODO(synk): torchsupport NeighbourLinear exact aggregation reconstructed (mean over K),
    # expressed here as an MXU pooling matmul (avoids in-kernel reshape / XLU reduction).
    att = jnp.dot(p_ref[...], y.astype(jnp.bfloat16), preferred_element_type=jnp.float32)

    h1 = h_ref[...] + att                                     # residual 1

    # 3-layer MLP (ReLU) + residual 2, all resident in VMEM.
    m = jnp.maximum(jnp.dot(h1.astype(jnp.bfloat16), w1_ref[...],
                            preferred_element_type=jnp.float32) + b1_ref[...], 0.0)
    m = jnp.maximum(jnp.dot(m.astype(jnp.bfloat16), w2_ref[...],
                            preferred_element_type=jnp.float32) + b2_ref[...], 0.0)
    m = jnp.dot(m.astype(jnp.bfloat16), w3_ref[...],
                preferred_element_type=jnp.float32) + b3_ref[...]
    o_ref[...] = h1 + m


# ----------------------------------------------------------------------------- wrappers
def local_features(lp, x):
    """LocalFeatures(6, size, depth=1) + encoder preprocessor. x: [B, L, 6] -> [B, L, size]."""
    B, L, _ = x.shape
    C = lp["b1"].shape[1]
    xpad = jnp.pad(x, ((0, 0), (1, 1), (0, 0)))
    # im2col columns for the k=3 conv (k-major channel order), built once in XLA.
    xcol = jnp.concatenate([xpad[:, 0:L], xpad[:, 1:L + 1], xpad[:, 2:L + 2]],
                           axis=-1).astype(jnp.bfloat16)       # [B, L, 18]
    return pl.pallas_call(
        _local_features_kernel,
        out_shape=jax.ShapeDtypeStruct((B, L, C), jnp.float32),
        grid=(B,),
        in_specs=[pl.BlockSpec((1, L, 18), lambda b: (b, 0, 0)),
                  pl.BlockSpec((18, C), lambda b: (0, 0)),
                  pl.BlockSpec((1, C), lambda b: (0, 0)),
                  pl.BlockSpec((3, C, C), lambda b: (0, 0, 0)),
                  pl.BlockSpec((1, C), lambda b: (0, 0)),
                  pl.BlockSpec((C, C), lambda b: (0, 0)),
                  pl.BlockSpec((1, C), lambda b: (0, 0))],
        out_specs=pl.BlockSpec((1, L, C), lambda b: (b, 0, 0)),
        scratch_shapes=[pltpu.VMEM((L + 4, C), jnp.float32)],
        compiler_params=pltpu.CompilerParams(dimension_semantics=("parallel",)),
    )(xcol, lp["w1"], lp["b1"], lp["w2"], lp["b2"], lp["pre_w"], lp["pre_b"])


def encoder_forward(blocks, h, connections, rel):
    """StructuredTransformerEncoder blocks (linear_connected, pre_norm, no batch_norm)."""
    N, K = connections.shape
    S = h.shape[1]
    Dp = blocks[0]["att_wr"].shape[0]          # relative-feature dim padded to a multiple of 8
    H = blocks[0]["mlp_w2"].shape[0]
    d_rel = rel.shape[-1]
    rel_flat = jnp.pad(rel, ((0, 0), (0, 0), (0, Dp - d_rel)))
    rel_flat = rel_flat.reshape(N * K, Dp).astype(jnp.bfloat16)

    TM = N if N <= 128 else 128                # row tile; "parallel" grid feeds both v7x cores
    assert N % TM == 0
    grid = (N // TM,)
    # mean-over-K pooling matrix: att[n] = (1/K) * sum_k y[n*K + k]
    pool = jnp.where(jnp.arange(TM)[:, None] == jnp.arange(TM * K)[None, :] // K,
                     1.0 / K, 0.0).astype(jnp.bfloat16)

    row = lambda i: (i, 0)
    rep = lambda i: (0, 0)
    in_specs = [
        pl.BlockSpec((TM * K, S), row),        # gathered neighbour features
        pl.BlockSpec((TM * K, Dp), row),       # relative features
        pl.BlockSpec((TM, S), row),            # residual stream h
        pl.BlockSpec((TM, TM * K), rep),       # pooling matrix (VMEM resident)
        pl.BlockSpec((S, S), rep), pl.BlockSpec((Dp, S), rep), pl.BlockSpec((1, S), rep),
        pl.BlockSpec((S, H), rep), pl.BlockSpec((1, H), rep),
        pl.BlockSpec((H, H), rep), pl.BlockSpec((1, H), rep),
        pl.BlockSpec((H, S), rep), pl.BlockSpec((1, S), rep),
    ]
    out_spec = pl.BlockSpec((TM, S), row)

    for blk in blocks:
        g_flat = h[connections].reshape(N * K, S).astype(jnp.bfloat16)   # gather in XLA
        h = pl.pallas_call(
            _encoder_block_kernel,
            out_shape=jax.ShapeDtypeStruct((N, S), jnp.float32),
            grid=grid,
            in_specs=in_specs,
            out_specs=out_spec,
            compiler_params=pltpu.CompilerParams(dimension_semantics=("parallel",)),
        )(g_flat, rel_flat, h, pool,
          blk["att_wh"], blk["att_wr"], blk["att_b"],
          blk["mlp_w1"], blk["mlp_b1"], blk["mlp_w2"], blk["mlp_b2"],
          blk["mlp_w3"], blk["mlp_b3"])
    return h


# ----------------------------------------------------------------------------- plain-JAX geometry glue
def position_lookup(angles):
    """angles [N,3] (phi,psi,omega) -> backbone coords [N, 3(atoms N,CA,C), 3(xyz)].
    # TODO(synk): exact fragment-based PositionLookup source unavailable; simplified NeRF chain."""
    n_ca, ca_c, c_n = 1.458, 1.525, 1.329
    ang_n_ca_c, ang_ca_c_n, ang_c_n_ca = 1.941, 2.035, 2.124

    def place(a, b, c, length, theta, chi):
        bc = _normalize(c - b)
        nrm = _normalize(jnp.cross(b - a, bc))
        m = jnp.stack([bc, jnp.cross(nrm, bc), nrm], axis=1)
        d = length * jnp.stack([-jnp.cos(theta),
                                jnp.sin(theta) * jnp.cos(chi),
                                jnp.sin(theta) * jnp.sin(chi)])
        return c + m @ d

    def step(carry, ang):
        a, b, c = carry
        phi, psi, omega = ang[0], ang[1], ang[2]
        n_at = place(a, b, c, c_n, ang_ca_c_n, omega)
        ca_at = place(b, c, n_at, n_ca, ang_c_n_ca, phi)
        c_at = place(c, n_at, ca_at, ca_c, ang_n_ca_c, psi)
        return (n_at, ca_at, c_at), jnp.stack([n_at, ca_at, c_at], axis=0)

    a0 = jnp.array([0.0, 0.0, 0.0], jnp.float32)
    b0 = jnp.array([1.458, 0.0, 0.0], jnp.float32)
    c0 = jnp.array([2.0, 1.42, 0.0], jnp.float32)
    _, tertiary = jax.lax.scan(step, (a0, b0, c0), angles)
    return tertiary


def orientation_frames(pos):
    """Local frame per residue from CA trace. # TODO(synk): orientation() source unavailable."""
    fwd = _normalize(jnp.roll(pos, -1, axis=0) - pos)
    bwd = _normalize(pos - jnp.roll(pos, 1, axis=0))
    nrm = _normalize(jnp.cross(bwd, fwd))
    b = _normalize(bwd - fwd)
    return jnp.stack([b, nrm, jnp.cross(b, nrm)], axis=-1)  # [N, 3, 3]


def knn_connections(pos, B, L, K):
    """Per-subgraph kNN of CA positions (self included), global indices [N, K]."""
    pb = pos.reshape(B, L, 3)
    d2 = jnp.sum((pb[:, :, None, :] - pb[:, None, :, :]) ** 2, axis=-1)
    _, nbr = jax.lax.top_k(-d2, K)                             # same ordering as -norm
    nbr = nbr + (jnp.arange(B) * L)[:, None, None]
    return nbr.reshape(B * L, K)


def relative_features(pos, frames, connections, rbf_lo, rbf_hi, rbf_n):
    """RelativeStructure.message reconstruction: rel pos in local frame (3) + rel rotation (9)
    + rel sequence index (1) + gaussian RBF of distance (rbf_n).
    # TODO(synk): exact RelativeStructure/gaussian_rbf definitions unavailable; reconstructed."""
    N, K = connections.shape
    pj = pos[connections]                                      # [N, K, 3]
    rel = pj - pos[:, None, :]
    ri_t = jnp.swapaxes(frames, -1, -2)                        # [N, 3, 3]
    rel_local = jnp.einsum('nij,nkj->nki', ri_t, rel)
    rj = frames[connections]                                   # [N, K, 3, 3]
    rel_rot = jnp.einsum('nij,nkjl->nkil', ri_t, rj).reshape(N, K, 9)
    inds = jnp.arange(N, dtype=jnp.float32)
    rel_ind = (inds[connections] - inds[:, None])[..., None]
    dist = jnp.sqrt(jnp.sum(rel * rel, axis=-1, keepdims=True) + 1e-12)   # eps inside the norm
    centers = jnp.linspace(rbf_lo, rbf_hi, rbf_n)
    sigma = (rbf_hi - rbf_lo) / rbf_n
    rbf = jnp.exp(-((dist - centers) ** 2) / (2.0 * sigma ** 2))
    return jnp.concatenate([rel_local, rel_rot, rel_ind, rbf], axis=-1)   # [N, K, 13 + rbf_n]


# ----------------------------------------------------------------------------- params
def init_params(key, size, d_rel, hidden, depth):
    ks = iter(jax.random.split(key, 10 + 10 * depth))

    def w(shape, scale=0.1):
        return scale * jax.random.normal(next(ks), shape, jnp.float32)

    params = {
        "local": {"w1": w((3, 6, size)), "b1": w((size,)),
                  "w2": w((3, size, size)), "b2": w((size,))},
        "enc": {"pre_w": w((size, size)), "pre_b": w((size,)), "blocks": []},
        "ap_w": w((size, 3), 0.05), "ap_b": w((3,), 0.05),
    }
    for _ in range(depth):
        params["enc"]["blocks"].append({
            "att_wh": w((size, size)), "att_wr": w((d_rel, size)), "att_b": w((size,)),
            "mlp_w1": w((size, hidden)), "mlp_b1": w((hidden,)),
            "mlp_w2": w((hidden, hidden)), "mlp_b2": w((hidden,)),
            "mlp_w3": w((hidden, size)), "mlp_b3": w((size,)),
        })
    return params


def prepare_params(params):
    """Convert to kernel-friendly layouts: bf16 matmul weights, f32 [1, ·] biases,
    k-major flattened conv-1 weight, relative-weight contraction padded to a multiple of 8."""
    bf16 = jnp.bfloat16
    lp = params["local"]
    size = lp["b1"].shape[0]
    local = {
        "w1": lp["w1"].reshape(-1, size).astype(bf16),         # [18, C] (k-major)
        "b1": lp["b1"].reshape(1, size),
        "w2": lp["w2"].astype(bf16),                           # [3, C, C]
        "b2": lp["b2"].reshape(1, size),
        "pre_w": params["enc"]["pre_w"].astype(bf16),
        "pre_b": params["enc"]["pre_b"].reshape(1, size),
    }
    d_rel = params["enc"]["blocks"][0]["att_wr"].shape[0]
    d_pad = ((d_rel + 7) // 8) * 8
    blocks = []
    for blk in params["enc"]["blocks"]:
        blocks.append({
            "att_wh": blk["att_wh"].astype(bf16),
            "att_wr": jnp.pad(blk["att_wr"], ((0, d_pad - d_rel), (0, 0))).astype(bf16),
            "att_b": blk["att_b"].reshape(1, -1),
            "mlp_w1": blk["mlp_w1"].astype(bf16), "mlp_b1": blk["mlp_b1"].reshape(1, -1),
            "mlp_w2": blk["mlp_w2"].astype(bf16), "mlp_b2": blk["mlp_b2"].reshape(1, -1),
            "mlp_w3": blk["mlp_w3"].astype(bf16), "mlp_b3": blk["mlp_b3"].reshape(1, -1),
        })
    return local, blocks


# ----------------------------------------------------------------------------- ModifierGenerator.forward
def modifier_forward(params, angles, *, B, L, K, repeats, rbf):
    N = B * L
    size = params["enc"]["pre_w"].shape[0]
    local_p, blocks_p = prepare_params(params)
    for _ in range(repeats):
        tertiary = position_lookup(angles)                     # [N, 3, 3]
        afeat = jnp.concatenate([jnp.sin(angles), jnp.cos(angles)], axis=1)  # [N, 6]
        h = local_features(local_p, afeat.reshape(B, L, 6)).reshape(N, size)
        pos = tertiary[:, 1]                                   # CA positions
        frames = orientation_frames(pos)
        connections = knn_connections(pos, B, L, K)
        rel = relative_features(pos, frames, connections, *rbf)
        corr = encoder_forward(blocks_p, h, connections, rel)
        # AngleProject (size -> 3) + angle update left to XLA: a 3-lane Pallas output would be
        # masked partial stores + pure launch overhead.
        # TODO(synk): AngleProject exact definition unavailable; implemented as Linear(size, 3).
        angles = angles + (corr @ params["ap_w"] + params["ap_b"])
    return angles


# ----------------------------------------------------------------------------- main
if __name__ == "__main__":
    B, L, K = 2, 16, 8            # 2 subgraphs of equal length 16 (N = 32 residues)
    SIZE, DK, HID, DEPTH = 32, 16, 128, 2
    REPEATS = 2                   # module default is 5; kept small for the demo
    D_REL = 3 + 9 + 1 + DK        # == (distance_size=14) + distance_kernels - 1
    N = B * L

    key = jax.random.PRNGKey(0)
    kp, ka = jax.random.split(key)
    params = init_params(kp, SIZE, D_REL, HID, DEPTH)
    # sample(): latents = 6.3 * rand(N, 3); equal lengths used so scatter.batched == batching.
    angles = 6.3 * jax.random.uniform(ka, (N, 3), jnp.float32)

    fwd = jax.jit(functools.partial(modifier_forward, B=B, L=L, K=K,
                                    repeats=REPEATS, rbf=(0.0, 20.0, DK)))
    out = fwd(params, angles)
    jax.block_until_ready(out)
    assert out.shape == (N, 3)
    assert bool(jnp.isfinite(out).all())
    print("KERNEL_OK")
</pallas_src>

<mosaic_0001>
module attributes {stable_mosaic.version = 11 : i64} {
  func.func @_local_features_kernel(%arg0: i32, %arg1: memref<1x16x18xbf16, #tpu.memory_space<vmem>>, %arg2: memref<18x32xbf16, #tpu.memory_space<vmem>>, %arg3: memref<1x32xf32, #tpu.memory_space<vmem>>, %arg4: memref<3x32x32xbf16, #tpu.memory_space<vmem>>, %arg5: memref<1x32xf32, #tpu.memory_space<vmem>>, %arg6: memref<32x32xbf16, #tpu.memory_space<vmem>>, %arg7: memref<1x32xf32, #tpu.memory_space<vmem>>, %arg8: memref<1x16x32xf32, #tpu.memory_space<vmem>>, %arg9: memref<20x32xf32, #tpu.memory_space<vmem>>) attributes {dimension_semantics = [#tpu.dimension_semantics<parallel>], iteration_bounds = array<i64: 2>, scalar_prefetch = 0 : i64, scratch_operands = 1 : i64, tpu.core_type = #tpu.core_type<tc>, window_params = [{transform_indices = @transform_0, window_bounds = array<i64: 1, 16, 18>}, {pipeline_mode = #tpu.pipeline_mode<synchronous>, transform_indices = @transform_1, window_bounds = array<i64: 18, 32>}, {pipeline_mode = #tpu.pipeline_mode<synchronous>, transform_indices = @transform_2, window_bounds = array<i64: 1, 32>}, {pipeline_mode = #tpu.pipeline_mode<synchronous>, transform_indices = @transform_3, window_bounds = array<i64: 3, 32, 32>}, {pipeline_mode = #tpu.pipeline_mode<synchronous>, transform_indices = @transform_4, window_bounds = array<i64: 1, 32>}, {pipeline_mode = #tpu.pipeline_mode<synchronous>, transform_indices = @transform_5, window_bounds = array<i64: 32, 32>}, {pipeline_mode = #tpu.pipeline_mode<synchronous>, transform_indices = @transform_6, window_bounds = array<i64: 1, 32>}, {transform_indices = @transform_7, window_bounds = array<i64: 1, 16, 32>}]} {
    %c0 = arith.constant 0 : index
    %c0_0 = arith.constant 0 : index
    %c0_1 = arith.constant 0 : index
    %0 = vector.load %arg1[%c0, %c0_0, %c0_1] : memref<1x16x18xbf16, #tpu.memory_space<vmem>>, vector<1x16x18xbf16>
    %1 = vector.shape_cast %0 : vector<1x16x18xbf16> to vector<16x18xbf16>
    %c0_2 = arith.constant 0 : index
    %c0_3 = arith.constant 0 : index
    %2 = vector.load %arg2[%c0_2, %c0_3] : memref<18x32xbf16, #tpu.memory_space<vmem>>, vector<18x32xbf16>
    %cst = arith.constant dense<0.000000e+00> : vector<16x32xf32>
    %3 = tpu.matmul %1, %2, %cst {dimension_numbers = #tpu.dot_dimension_numbers<[1], [0], [0], [1], [0, 0, 1, 1], [], []>} : vector<16x18xbf16>, vector<18x32xbf16>, vector<16x32xf32> -> vector<16x32xf32>
    %c0_4 = arith.constant 0 : index
    %c0_5 = arith.constant 0 : index
    %4 = vector.load %arg3[%c0_4, %c0_5] : memref<1x32xf32, #tpu.memory_space<vmem>>, vector<1x32xf32>
    %5 = vector.broadcast %4 : vector<1x32xf32> to vector<16x32xf32>
    %6 = arith.addf %3, %5 : vector<16x32xf32>
    %cst_6 = arith.constant 0.000000e+00 : f32
    %7 = vector.broadcast %cst_6 : f32 to vector<16x32xf32>
    %8 = arith.cmpf ogt, %6, %7 : vector<16x32xf32>
    %cst_7 = arith.constant 0.000000e+00 : f32
    %9 = vector.broadcast %cst_7 : f32 to vector<16x32xf32>
    %10 = arith.minimumf %6, %9 : vector<16x32xf32>
    %11 = math.exp %10 : vector<16x32xf32>
    %cst_8 = arith.constant 1.000000e+00 : f32
    %12 = vector.broadcast %cst_8 : f32 to vector<16x32xf32>
    %13 = arith.subf %11, %12 : vector<16x32xf32>
    %14 = arith.select %8, %6, %13 : vector<16x32xi1>, vector<16x32xf32>
    %cst_9 = arith.constant dense<0.000000e+00> : vector<32xf32>
    %15 = vector.multi_reduction <add>, %14, %cst_9 [0] : vector<16x32xf32> to vector<32xf32>
    %16 = vector.shape_cast %15 : vector<32xf32> to vector<1x32xf32>
    %cst_10 = arith.constant 1.600000e+01 : f32
    %17 = vector.broadcast %cst_10 : f32 to vector<1x32xf32>
    %18 = arith.divf %16, %17 : vector<1x32xf32>
    %19 = vector.broadcast %18 : vector<1x32xf32> to vector<16x32xf32>
    %20 = arith.subf %14, %19 : vector<16x32xf32>
    %21 = arith.mulf %20, %20 : vector<16x32xf32>
    %cst_11 = arith.constant dense<0.000000e+00> : vector<32xf32>
    %22 = vector.multi_reduction <add>, %21, %cst_11 [0] : vector<16x32xf32> to vector<32xf32>
    %23 = vector.shape_cast %22 : vector<32xf32> to vector<1x32xf32>
    %cst_12 = arith.constant 1.600000e+01 : f32
    %24 = vector.broadcast %cst_12 : f32 to vector<1x32xf32>
    %25 = arith.divf %23, %24 : vector<1x32xf32>
    %26 = vector.broadcast %18 : vector<1x32xf32> to vector<16x32xf32>
    %27 = arith.subf %14, %26 : vector<16x32xf32>
    %cst_13 = arith.constant 9.99999974E-6 : f32
    %28 = vector.broadcast %cst_13 : f32 to vector<1x32xf32>
    %29 = arith.addf %25, %28 : vector<1x32xf32>
    %30 = math.rsqrt %29 : vector<1x32xf32>
    %31 = vector.broadcast %30 : vector<1x32xf32> to vector<16x32xf32>
    %32 = arith.mulf %27, %31 : vector<16x32xf32>
    %cst_14 = arith.constant 0.000000e+00 : f32
    %33 = vector.broadcast %cst_14 : f32 to vector<20x32xf32>
    %c0_15 = arith.constant 0 : index
    %c0_16 = arith.constant 0 : index
    %34 = vector.load %arg9[%c0_15, %c0_16] : memref<20x32xf32, #tpu.memory_space<vmem>>, vector<20x32xf32>
    tpu.vector_store %arg9[%c0_15, %c0_16], %33 {strides = array<i32>} : memref<20x32xf32, #tpu.memory_space<vmem>>, vector<20x32xf32>,
    %c2 = arith.constant 2 : index
    %c0_17 = arith.constant 0 : index
    %35 = vector.load %arg9[%c2, %c0_17] : memref<20x32xf32, #tpu.memory_space<vmem>>, vector<16x32xf32>
    tpu.vector_store %arg9[%c2, %c0_17], %32 {strides = array<i32>} : memref<20x32xf32, #tpu.memory_space<vmem>>, vector<16x32xf32>,
    %c0_18 = arith.constant 0 : index
    %c0_19 = arith.constant 0 : index
    %36 = vector.load %arg9[%c0_18, %c0_19] : memref<20x32xf32, #tpu.memory_space<vmem>>, vector<16x32xf32>
    %37 = arith.truncf %36 : vector<16x32xf32> to vector<16x32xbf16>
    %c0_20 = arith.constant 0 : index
    %c0_21 = arith.constant 0 : index
    %c0_22 = arith.constant 0 : index
    %38 = vector.load %arg4[%c0_20, %c0_21, %c0_22] : memref<3x32x32xbf16, #tpu.memory_space<vmem>>, vector<1x32x32xbf16>
    %39 = vector.shape_cast %38 : vector<1x32x32xbf16> to vector<32x32xbf16>
    %cst_23 = arith.constant dense<0.000000e+00> : vector<16x32xf32>
    %40 = tpu.matmul %37, %39, %cst_23 {dimension_numbers = #tpu.dot_dimension_numbers<[1], [0], [0], [1], [0, 0, 1, 1], [], []>} : vector<16x32xbf16>, vector<32x32xbf16>, vector<16x32xf32> -> vector<16x32xf32>
    %c2_24 = arith.constant 2 : index
    %c0_25 = arith.constant 0 : index
    %41 = vector.load %arg9[%c2_24, %c0_25] : memref<20x32xf32, #tpu.memory_space<vmem>>, vector<16x32xf32>
    %42 = arith.truncf %41 : vector<16x32xf32> to vector<16x32xbf16>
    %c1 = arith.constant 1 : index
    %c0_26 = arith.constant 0 : index
    %c0_27 = arith.constant 0 : index
    %43 = vector.load %arg4[%c1, %c0_26, %c0_27] : memref<3x32x32xbf16, #tpu.memory_space<vmem>>, vector<1x32x32xbf16>
    %44 = vector.shape_cast %43 : vector<1x32x32xbf16> to vector<32x32xbf16>
    %cst_28 = arith.constant dense<0.000000e+00> : vector<16x32xf32>
    %45 = tpu.matmul %42, %44, %cst_28 {dimension_numbers = #tpu.dot_dimension_numbers<[1], [0], [0], [1], [0, 0, 1, 1], [], []>} : vector<16x32xbf16>, vector<32x32xbf16>, vector<16x32xf32> -> vector<16x32xf32>
    %46 = arith.addf %40, %45 : vector<16x32xf32>
    %c4 = arith.constant 4 : index
    %c0_29 = arith.constant 0 : index
    %47 = vector.load %arg9[%c4, %c0_29] : memref<20x32xf32, #tpu.memory_space<vmem>>, vector<16x32xf32>
    %48 = arith.truncf %47 : vector<16x32xf32> to vector<16x32xbf16>
    %c2_30 = arith.constant 2 : index
    %c0_31 = arith.constant 0 : index
    %c0_32 = arith.constant 0 : index
    %49 = vector.load %arg4[%c2_30, %c0_31, %c0_32] : memref<3x32x32xbf16, #tpu.memory_space<vmem>>, vector<1x32x32xbf16>
    %50 = vector.shape_cast %49 : vector<1x32x32xbf16> to vector<32x32xbf16>
    %cst_33 = arith.constant dense<0.000000e+00> : vector<16x32xf32>
    %51 = tpu.matmul %48, %50, %cst_33 {dimension_numbers = #tpu.dot_dimension_numbers<[1], [0], [0], [1], [0, 0, 1, 1], [], []>} : vector<16x32xbf16>, vector<32x32xbf16>, vector<16x32xf32> -> vector<16x32xf32>
    %52 = arith.addf %46, %51 : vector<16x32xf32>
    %c0_34 = arith.constant 0 : index
    %c0_35 = arith.constant 0 : index
    %53 = vector.load %arg5[%c0_34, %c0_35] : memref<1x32xf32, #tpu.memory_space<vmem>>, vector<1x32xf32>
    %54 = vector.broadcast %53 : vector<1x32xf32> to vector<16x32xf32>
    %55 = arith.addf %52, %54 : vector<16x32xf32>
    %56 = arith.addf %55, %14 : vector<16x32xf32>
    %cst_36 = arith.constant 0.000000e+00 : f32
    %57 = vector.broadcast %cst_36 : f32 to vector<16x32xf32>
    %58 = arith.cmpf ogt, %56, %57 : vector<16x32xf32>
    %cst_37 = arith.constant 0.000000e+00 : f32
    %59 = vector.broadcast %cst_37 : f32 to vector<16x32xf32>
    %60 = arith.minimumf %56, %59 : vector<16x32xf32>
    %61 = math.exp %60 : vector<16x32xf32>
    %cst_38 = arith.constant 1.000000e+00 : f32
    %62 = vector.broadcast %cst_38 : f32 to vector<16x32xf32>
    %63 = arith.subf %61, %62 : vector<16x32xf32>
    %64 = arith.select %58, %56, %63 : vector<16x32xi1>, vector<16x32xf32>
    %65 = arith.truncf %64 : vector<16x32xf32> to vector<16x32xbf16>
    %c0_39 = arith.constant 0 : index
    %c0_40 = arith.constant 0 : index
    %66 = vector.load %arg6[%c0_39, %c0_40] : memref<32x32xbf16, #tpu.memory_space<vmem>>, vector<32x32xbf16>
    %cst_41 = arith.constant dense<0.000000e+00> : vector<16x32xf32>
    %67 = tpu.matmul %65, %66, %cst_41 {dimension_numbers = #tpu.dot_dimension_numbers<[1], [0], [0], [1], [0, 0, 1, 1], [], []>} : vector<16x32xbf16>, vector<32x32xbf16>, vector<16x32xf32> -> vector<16x32xf32>
    %c0_42 = arith.constant 0 : index
    %c0_43 = arith.constant 0 : index
    %68 = vector.load %arg7[%c0_42, %c0_43] : memref<1x32xf32, #tpu.memory_space<vmem>>, vector<1x32xf32>
    %69 = vector.broadcast %68 : vector<1x32xf32> to vector<16x32xf32>
    %70 = arith.addf %67, %69 : vector<16x32xf32>
    %c0_44 = arith.constant 0 : index
    %c0_45 = arith.constant 0 : index
    %c0_46 = arith.constant 0 : index
    %71 = vector.load %arg8[%c0_44, %c0_45, %c0_46] : memref<1x16x32xf32, #tpu.memory_space<vmem>>, vector<1x16x32xf32>
    %72 = vector.shape_cast %71 : vector<1x16x32xf32> to vector<16x32xf32>
    %73 = vector.shape_cast %70 : vector<16x32xf32> to vector<1x16x32xf32>
    tpu.vector_store %arg8[%c0_44, %c0_45, %c0_46], %73 {strides = array<i32>} : memref<1x16x32xf32, #tpu.memory_space<vmem>>, vector<1x16x32xf32>,
    return
  }
  func.func @transform_0(%arg0: i32) -> (i32, i32, i32) {
    %c0_i32 = arith.constant 0 : i32
    %c0_i32_0 = arith.constant 0 : i32
    %c0_i32_1 = arith.constant 0 : i32
    return %arg0, %c0_i32, %c0_i32_0 : i32, i32, i32
  }
  func.func @transform_1(%arg0: i32) -> (i32, i32) {
    %c0_i32 = arith.constant 0 : i32
    %c0_i32_0 = arith.constant 0 : i32
    %c0_i32_1 = arith.constant 0 : i32
    return %c0_i32, %c0_i32_0 : i32, i32
  }
  func.func @transform_2(%arg0: i32) -> (i32, i32) {
    %c0_i32 = arith.constant 0 : i32
    %c0_i32_0 = arith.constant 0 : i32
    %c0_i32_1 = arith.constant 0 : i32
    return %c0_i32, %c0_i32_0 : i32, i32
  }
  func.func @transform_3(%arg0: i32) -> (i32, i32, i32) {
    %c0_i32 = arith.constant 0 : i32
    %c0_i32_0 = arith.constant 0 : i32
    %c0_i32_1 = arith.constant 0 : i32
    %c0_i32_2 = arith.constant 0 : i32
    return %c0_i32, %c0_i32_0, %c0_i32_1 : i32, i32, i32
  }
  func.func @transform_4(%arg0: i32) -> (i32, i32) {
    %c0_i32 = arith.constant 0 : i32
    %c0_i32_0 = arith.constant 0 : i32
    %c0_i32_1 = arith.constant 0 : i32
    return %c0_i32, %c0_i32_0 : i32, i32
  }
  func.func @transform_5(%arg0: i32) -> (i32, i32) {
    %c0_i32 = arith.constant 0 : i32
    %c0_i32_0 = arith.constant 0 : i32
    %c0_i32_1 = arith.constant 0 : i32
    return %c0_i32, %c0_i32_0 : i32, i32
  }
  func.func @transform_6(%arg0: i32) -> (i32, i32) {
    %c0_i32 = arith.constant 0 : i32
    %c0_i32_0 = arith.constant 0 : i32
    %c0_i32_1 = arith.constant 0 : i32
    return %c0_i32, %c0_i32_0 : i32, i32
  }
  func.func @transform_7(%arg0: i32) -> (i32, i32, i32) {
    %c0_i32 = arith.constant 0 : i32
    %c0_i32_0 = arith.constant 0 : i32
    %c0_i32_1 = arith.constant 0 : i32
    return %arg0, %c0_i32, %c0_i32_0 : i32, i32, i32
  }
}

module attributes {stable_mosaic.version = 11 : i64} {
  func.func @_encoder_block_kernel(%arg0: i32, %arg1: memref<256x32xbf16, #tpu.memory_space<vmem>>, %arg2: memref<256x32xbf16, #tpu.memory_space<vmem>>, %arg3: memref<32x32xf32, #tpu.memory_space<vmem>>, %arg4: memref<32x256xbf16, #tpu.memory_space<vmem>>, %arg5: memref<32x32xbf16, #tpu.memory_space<vmem>>, %arg6: memref<32x32xbf16, #tpu.memory_space<vmem>>, %arg7: memref<1x32xf32, #tpu.memory_space<vmem>>, %arg8: memref<32x128xbf16, #tpu.memory_space<vmem>>, %arg9: memref<1x128xf32, #tpu.memory_space<vmem>>, %arg10: memref<128x128xbf16, #tpu.memory_space<vmem>>, %arg11: memref<1x128xf32, #tpu.memory_space<vmem>>, %arg12: memref<128x32xbf16, #tpu.memory_space<vmem>>, %arg13: memref<1x32xf32, #tpu.memory_space<vmem>>, %arg14: memref<32x32xf32, #tpu.memory_space<vmem>>) attributes {dimension_semantics = [#tpu.dimension_semantics<parallel>], iteration_bounds = array<i64: 1>, scalar_prefetch = 0 : i64, scratch_operands = 0 : i64, tpu.core_type = #tpu.core_type<tc>, window_params = [{transform_indices = @transform_0, window_bounds = array<i64: 256, 32>}, {transform_indices = @transform_1, window_bounds = array<i64: 256, 32>}, {transform_indices = @transform_2, window_bounds = array<i64: 32, 32>}, {pipeline_mode = #tpu.pipeline_mode<synchronous>, transform_indices = @transform_3, window_bounds = array<i64: 32, 256>}, {pipeline_mode = #tpu.pipeline_mode<synchronous>, transform_indices = @transform_4, window_bounds = array<i64: 32, 32>}, {pipeline_mode = #tpu.pipeline_mode<synchronous>, transform_indices = @transform_5, window_bounds = array<i64: 32, 32>}, {pipeline_mode = #tpu.pipeline_mode<synchronous>, transform_indices = @transform_6, window_bounds = array<i64: 1, 32>}, {pipeline_mode = #tpu.pipeline_mode<synchronous>, transform_indices = @transform_7, window_bounds = array<i64: 32, 128>}, {pipeline_mode = #tpu.pipeline_mode<synchronous>, transform_indices = @transform_8, window_bounds = array<i64: 1, 128>}, {pipeline_mode = #tpu.pipeline_mode<synchronous>, transform_indices = @transform_9, window_bounds = array<i64: 128, 128>}, {pipeline_mode = #tpu.pipeline_mode<synchronous>, transform_indices = @transform_10, window_bounds = array<i64: 1, 128>}, {pipeline_mode = #tpu.pipeline_mode<synchronous>, transform_indices = @transform_11, window_bounds = array<i64: 128, 32>}, {pipeline_mode = #tpu.pipeline_mode<synchronous>, transform_indices = @transform_12, window_bounds = array<i64: 1, 32>}, {transform_indices = @transform_13, window_bounds = array<i64: 32, 32>}]} {
    %c0 = arith.constant 0 : index
    %c0_0 = arith.constant 0 : index
    %0 = vector.load %arg1[%c0, %c0_0] : memref<256x32xbf16, #tpu.memory_space<vmem>>, vector<256x32xbf16>
    %c0_1 = arith.constant 0 : index
    %c0_2 = arith.constant 0 : index
    %1 = vector.load %arg5[%c0_1, %c0_2] : memref<32x32xbf16, #tpu.memory_space<vmem>>, vector<32x32xbf16>
    %cst = arith.constant dense<0.000000e+00> : vector<256x32xf32>
    %2 = tpu.matmul %0, %1, %cst {dimension_numbers = #tpu.dot_dimension_numbers<[1], [0], [0], [1], [0, 0, 1, 1], [], []>} : vector<256x32xbf16>, vector<32x32xbf16>, vector<256x32xf32> -> vector<256x32xf32>
    %c0_3 = arith.constant 0 : index
    %c0_4 = arith.constant 0 : index
    %3 = vector.load %arg2[%c0_3, %c0_4] : memref<256x32xbf16, #tpu.memory_space<vmem>>, vector<256x32xbf16>
    %c0_5 = arith.constant 0 : index
    %c0_6 = arith.constant 0 : index
    %4 = vector.load %arg6[%c0_5, %c0_6] : memref<32x32xbf16, #tpu.memory_space<vmem>>, vector<32x32xbf16>
    %cst_7 = arith.constant dense<0.000000e+00> : vector<256x32xf32>
    %5 = tpu.matmul %3, %4, %cst_7 {dimension_numbers = #tpu.dot_dimension_numbers<[1], [0], [0], [1], [0, 0, 1, 1], [], []>} : vector<256x32xbf16>, vector<32x32xbf16>, vector<256x32xf32> -> vector<256x32xf32>
    %6 = arith.addf %2, %5 : vector<256x32xf32>
    %c0_8 = arith.constant 0 : index
    %c0_9 = arith.constant 0 : index
    %7 = vector.load %arg7[%c0_8, %c0_9] : memref<1x32xf32, #tpu.memory_space<vmem>>, vector<1x32xf32>
    %8 = vector.broadcast %7 : vector<1x32xf32> to vector<256x32xf32>
    %9 = arith.addf %6, %8 : vector<256x32xf32>
    %cst_10 = arith.constant 0.000000e+00 : f32
    %10 = vector.broadcast %cst_10 : f32 to vector<256x32xf32>
    %11 = arith.maximumf %9, %10 : vector<256x32xf32>
    %c0_11 = arith.constant 0 : index
    %c0_12 = arith.constant 0 : index
    %12 = vector.load %arg4[%c0_11, %c0_12] : memref<32x256xbf16, #tpu.memory_space<vmem>>, vector<32x256xbf16>
    %13 = arith.truncf %11 : vector<256x32xf32> to vector<256x32xbf16>
    %cst_13 = arith.constant dense<0.000000e+00> : vector<32x32xf32>
    %14 = tpu.matmul %12, %13, %cst_13 {dimension_numbers = #tpu.dot_dimension_numbers<[1], [0], [0], [1], [0, 0, 1, 1], [], []>} : vector<32x256xbf16>, vector<256x32xbf16>, vector<32x32xf32> -> vector<32x32xf32>
    %c0_14 = arith.constant 0 : index
    %c0_15 = arith.constant 0 : index
    %15 = vector.load %arg3[%c0_14, %c0_15] : memref<32x32xf32, #tpu.memory_space<vmem>>, vector<32x32xf32>
    %16 = arith.addf %15, %14 : vector<32x32xf32>
    %17 = arith.truncf %16 : vector<32x32xf32> to vector<32x32xbf16>
    %c0_16 = arith.constant 0 : index
    %c0_17 = arith.constant 0 : index
    %18 = vector.load %arg8[%c0_16, %c0_17] : memref<32x128xbf16, #tpu.memory_space<vmem>>, vector<32x128xbf16>
    %cst_18 = arith.constant dense<0.000000e+00> : vector<32x128xf32>
    %19 = tpu.matmul %17, %18, %cst_18 {dimension_numbers = #tpu.dot_dimension_numbers<[1], [0], [0], [1], [0, 0, 1, 1], [], []>} : vector<32x32xbf16>, vector<32x128xbf16>, vector<32x128xf32> -> vector<32x128xf32>
    %c0_19 = arith.constant 0 : index
    %c0_20 = arith.constant 0 : index
    %20 = vector.load %arg9[%c0_19, %c0_20] : memref<1x128xf32, #tpu.memory_space<vmem>>, vector<1x128xf32>
    %21 = vector.broadcast %20 : vector<1x128xf32> to vector<32x128xf32>
    %22 = arith.addf %19, %21 : vector<32x128xf32>
    %cst_21 = arith.constant 0.000000e+00 : f32
    %23 = vector.broadcast %cst_21 : f32 to vector<32x128xf32>
    %24 = arith.maximumf %22, %23 : vector<32x128xf32>
    %25 = arith.truncf %24 : vector<32x128xf32> to vector<32x128xbf16>
    %c0_22 = arith.constant 0 : index
    %c0_23 = arith.constant 0 : index
    %26 = vector.load %arg10[%c0_22, %c0_23] : memref<128x128xbf16, #tpu.memory_space<vmem>>, vector<128x128xbf16>
    %cst_24 = arith.constant dense<0.000000e+00> : vector<32x128xf32>
    %27 = tpu.matmul %25, %26, %cst_24 {dimension_numbers = #tpu.dot_dimension_numbers<[1], [0], [0], [1], [0, 0, 1, 1], [], []>} : vector<32x128xbf16>, vector<128x128xbf16>, vector<32x128xf32> -> vector<32x128xf32>
    %c0_25 = arith.constant 0 : index
    %c0_26 = arith.constant 0 : index
    %28 = vector.load %arg11[%c0_25, %c0_26] : memref<1x128xf32, #tpu.memory_space<vmem>>, vector<1x128xf32>
    %29 = vector.broadcast %28 : vector<1x128xf32> to vector<32x128xf32>
    %30 = arith.addf %27, %29 : vector<32x128xf32>
    %cst_27 = arith.constant 0.000000e+00 : f32
    %31 = vector.broadcast %cst_27 : f32 to vector<32x128xf32>
    %32 = arith.maximumf %30, %31 : vector<32x128xf32>
    %33 = arith.truncf %32 : vector<32x128xf32> to vector<32x128xbf16>
    %c0_28 = arith.constant 0 : index
    %c0_29 = arith.constant 0 : index
    %34 = vector.load %arg12[%c0_28, %c0_29] : memref<128x32xbf16, #tpu.memory_space<vmem>>, vector<128x32xbf16>
    %cst_30 = arith.constant dense<0.000000e+00> : vector<32x32xf32>
    %35 = tpu.matmul %33, %34, %cst_30 {dimension_numbers = #tpu.dot_dimension_numbers<[1], [0], [0], [1], [0, 0, 1, 1], [], []>} : vector<32x128xbf16>, vector<128x32xbf16>, vector<32x32xf32> -> vector<32x32xf32>
    %c0_31 = arith.constant 0 : index
    %c0_32 = arith.constant 0 : index
    %36 = vector.load %arg13[%c0_31, %c0_32] : memref<1x32xf32, #tpu.memory_space<vmem>>, vector<1x32xf32>
    %37 = vector.broadcast %36 : vector<1x32xf32> to vector<32x32xf32>
    %38 = arith.addf %35, %37 : vector<32x32xf32>
    %39 = arith.addf %16, %38 : vector<32x32xf32>
    %c0_33 = arith.constant 0 : index
    %c0_34 = arith.constant 0 : index
    %40 = vector.load %arg14[%c0_33, %c0_34] : memref<32x32xf32, #tpu.memory_space<vmem>>, vector<32x32xf32>
    tpu.vector_store %arg14[%c0_33, %c0_34], %39 {strides = array<i32>} : memref<32x32xf32, #tpu.memory_space<vmem>>, vector<32x32xf32>,
    return
  }
  func.func @transform_0(%arg0: i32) -> (i32, i32) {
    %c0_i32 = arith.constant 0 : i32
    %c0_i32_0 = arith.constant 0 : i32
    return %arg0, %c0_i32 : i32, i32
  }
  func.func @transform_1(%arg0: i32) -> (i32, i32) {
    %c0_i32 = arith.constant 0 : i32
    %c0_i32_0 = arith.constant 0 : i32
    return %arg0, %c0_i32 : i32, i32
  }
  func.func @transform_2(%arg0: i32) -> (i32, i32) {
    %c0_i32 = arith.constant 0 : i32
    %c0_i32_0 = arith.constant 0 : i32
    return %arg0, %c0_i32 : i32, i32
  }
  func.func @transform_3(%arg0: i32) -> (i32, i32) {
    %c0_i32 = arith.constant 0 : i32
    %c0_i32_0 = arith.constant 0 : i32
    %c0_i32_1 = arith.constant 0 : i32
    return %c0_i32, %c0_i32_0 : i32, i32
  }
  func.func @transform_4(%arg0: i32) -> (i32, i32) {
    %c0_i32 = arith.constant 0 : i32
    %c0_i32_0 = arith.constant 0 : i32
    %c0_i32_1 = arith.constant 0 : i32
    return %c0_i32, %c0_i32_0 : i32, i32
  }
  func.func @transform_5(%arg0: i32) -> (i32, i32) {
    %c0_i32 = arith.constant 0 : i32
    %c0_i32_0 = arith.constant 0 : i32
    %c0_i32_1 = arith.constant 0 : i32
    return %c0_i32, %c0_i32_0 : i32, i32
  }
  func.func @transform_6(%arg0: i32) -> (i32, i32) {
    %c0_i32 = arith.constant 0 : i32
    %c0_i32_0 = arith.constant 0 : i32
    %c0_i32_1 = arith.constant 0 : i32
    return %c0_i32, %c0_i32_0 : i32, i32
  }
  func.func @transform_7(%arg0: i32) -> (i32, i32) {
    %c0_i32 = arith.constant 0 : i32
    %c0_i32_0 = arith.constant 0 : i32
    %c0_i32_1 = arith.constant 0 : i32
    return %c0_i32, %c0_i32_0 : i32, i32
  }
  func.func @transform_8(%arg0: i32) -> (i32, i32) {
    %c0_i32 = arith.constant 0 : i32
    %c0_i32_0 = arith.constant 0 : i32
    %c0_i32_1 = arith.constant 0 : i32
    return %c0_i32, %c0_i32_0 : i32, i32
  }
  func.func @transform_9(%arg0: i32) -> (i32, i32) {
    %c0_i32 = arith.constant 0 : i32
    %c0_i32_0 = arith.constant 0 : i32
    %c0_i32_1 = arith.constant 0 : i32
    return %c0_i32, %c0_i32_0 : i32, i32
  }
  func.func @transform_10(%arg0: i32) -> (i32, i32) {
    %c0_i32 = arith.constant 0 : i32
    %c0_i32_0 = arith.constant 0 : i32
    %c0_i32_1 = arith.constant 0 : i32
    return %c0_i32, %c0_i32_0 : i32, i32
  }
  func.func @transform_11(%arg0: i32) -> (i32, i32) {
    %c0_i32 = arith.constant 0 : i32
    %c0_i32_0 = arith.constant 0 : i32
    %c0_i32_1 = arith.constant 0 : i32
    return %c0_i32, %c0_i32_0 : i32, i32
  }
  func.func @transform_12(%arg0: i32) -> (i32, i32) {
    %c0_i32 = arith.constant 0 : i32
    %c0_i32_0 = arith.constant 0 : i32
    %c0_i32_1 = arith.constant 0 : i32
    return %c0_i32, %c0_i32_0 : i32, i32
  }
  func.func @transform_13(%arg0: i32) -> (i32, i32) {
    %c0_i32 = arith.constant 0 : i32
    %c0_i32_0 = arith.constant 0 : i32
    return %arg0, %c0_i32 : i32, i32
  }
}

</mosaic_0001>

<llo_original>
// kernel: custom-call
$region0: #{custom-call}
  %s0 = inlined_call_operand.vmem [shape: f32[3], index: 0, kind: output, shape index: {}]

// kernel: neg.4
$region0: #{neg.4}
  #allocation0 [shape = 's32[1]{0}', space=sflag, size = 0x4, scoped, tag = 'scoped memory for neg.4']
  %s0 = inlined_call_operand.vmem [shape: f32[2,16,16], index: 0, kind: input, shape index: {}]
  %s1 = inlined_call_operand.vmem [shape: f32[2,16,16], index: 1, kind: output, shape index: {}]
  %v2 = vld [vmem:[%s0] sm:$0xff]
  %3 = xla_tuple %v2
  %4 = xla_tuple %3
  %v5 = vxor.u32 %v2, 2147483648
  %6 = xla_tuple %v5
  %7 = vst [vmem:[%s1] sm:$0xff] %v5
  %s8 = scalar_lea.vmem %s0, 16
  %v9 = vld [vmem:[%s8] sm:$0xff]
  %10 = xla_tuple %v9
  %11 = xla_tuple %10
  %v12 = vxor.u32 %v9, 2147483648
  %13 = xla_tuple %v12
  %s14 = scalar_lea.vmem %s1, 16
  %15 = vst [vmem:[%s14] sm:$0xff] %v12
  %s16 = scalar_lea.vmem %s0, 8
  %v17 = vld [vmem:[%s16] sm:$0xff]
  %18 = xla_tuple %v17
  %19 = xla_tuple %18
  %v20 = vxor.u32 %v17, 2147483648
  %21 = xla_tuple %v20
  %s22 = scalar_lea.vmem %s1, 8
  %23 = vst [vmem:[%s22] sm:$0xff] %v20
  %s24 = scalar_lea.vmem %s0, 24
  %v25 = vld [vmem:[%s24] sm:$0xff]
  %26 = xla_tuple %v25
  %27 = xla_tuple %26
  %v28 = vxor.u32 %v25, 2147483648
  %29 = xla_tuple %v28
  %s30 = scalar_lea.vmem %s1, 24
  %31 = vst [vmem:[%s30] sm:$0xff] %v28

// kernel: modifier_forward.6
$region0: #{modifier_forward.6}
  #allocation0 [shape = 'u32[]', space=smem, size = 0x4, offset = 0x4, fixed_abs, tag = 'smem constant byte address 0x4 - core index']
  #allocation1 [shape = 'u32[72,128]{1,0:T(1,128)}', space=vmem, size = 0x9000, scoped, tag = 'internal scratch']
  #allocation2 [shape = 'f32[20,32]{1,0:T(8,128)}', space=vmem, size = 0x3000, scoped, tag = 'scratch operand']
  %s0 = inlined_call_operand.vmem [shape: bf16[2,16,18], index: 0, kind: input, shape index: {}]
  %s1 = inlined_call_operand.vmem [shape: bf16[18,32], index: 1, kind: input, shape index: {}]
  %s2 = inlined_call_operand.vmem [shape: f32[1,32], index: 2, kind: input, shape index: {}]
  %s3 = inlined_call_operand.vmem [shape: bf16[3,32,32], index: 3, kind: input, shape index: {}]
  %s4 = inlined_call_operand.vmem [shape: f32[1,32], index: 4, kind: input, shape index: {}]
  %s5 = inlined_call_operand.vmem [shape: bf16[32,32], index: 5, kind: input, shape index: {}]
  %s6 = inlined_call_operand.vmem [shape: f32[1,32], index: 6, kind: input, shape index: {}]
  %s7 = inlined_call_operand.vmem [shape: f32[2,16,32], index: 7, kind: output, shape index: {}]
  %s8 = sld [smem:[#allocation0]]
  $region61: #{modifier_forward.6} parent=0
    _
  %s10 = ssub.s32 1, %s8
  %s11 = scalar_select 0, %s10, %s8
  loop: start=0, step=1, limit=4
  $region2: #{modifier_forward.6} parent=0 // loop_pre_header
    _
  $region3: #{modifier_forward.6} parent=0 // loop_header
    %s13 = sphi 0, %s17
    %p14 = scmp.ge.s32.totalorder %s13, 4
    %s23 = sphi 0, %s25
    %s26 = sphi 0, %s23
    %s27 = sphi 0, %s26
    %s43 = sphi 0, %s27
    %s47 = sphi 0, %s47
    %s49 = sphi 0, %s47
    %s50 = sphi 0, %s49
    %s64 = sphi 0, %s50
    %s68 = sphi 0, %s68
    %s70 = sphi 0, %s68
    %s71 = sphi 0, %s70
    %s85 = sphi 0, %s71
    %s89 = sphi 0, %s89
    %s91 = sphi 0, %s89
    %s92 = sphi 0, %s91
    %s106 = sphi 0, %s92
    %s110 = sphi 0, %s110
    %s112 = sphi 0, %s110
    %s113 = sphi 0, %s112
    %s127 = sphi 0, %s113
    %s131 = sphi 0, %s131
    %s133 = sphi 0, %s131
    %s134 = sphi 0, %s133
    %s148 = sphi 0, %s134
    %s152 = sphi 0, %s152
    %s154 = sphi 0, %s152
    %s155 = sphi 0, %s154
    %s169 = sphi 0, %s155
    %s175 = sphi 0, %s177
    %s178 = sphi 0, %s175
    %s179 = sphi 0, %s178
    %s195 = sphi 0, %s179
  $region4: #{modifier_forward.6} parent=0 // loop_header_branch
    %16 = sbr.rel (%p14) target = $region8
  $region5: #{modifier_forward.6} parent=0 // loop_body
    %s18 = ssub.s32 %s13, 1
    %s19 = ssub.s32 %s13, 2
    %s20 = sadd.s32 %s13, 1
    %s21 = ssub.s32 %s13, %s20
    %p22 = scmp.eq.s32.totalorder %s21, 0
    %s24 = sadd.s32 %s23, 1
    %s25 = scalar_select %p22, %s23, %s24
    %p28 = pneg %p22
    %p29 = scmp.eq.s32.totalorder %s13, 1
    %p30 = por %p28, %p29
    %p31 = scmp.ne.s32.totalorder %s23, %s26
    %p32 = scmp.eq.s32.totalorder %s13, 0
    %p33 = por %p31, %p32
    %p34 = scmp.ne.s32.totalorder %s23, %s26
    %p35 = scmp.eq.s32.totalorder %s18, 1
    %p36 = por %p34, %p35
    %p37 = scmp.ne.s32.totalorder %s26, %s27
    %p38 = scmp.eq.s32.totalorder %s18, 0
    %p39 = por %p37, %p38
    %p40 = scmp.ne.s32.totalorder %s26, %s27
    %p41 = scmp.eq.s32.totalorder %s19, 1
    %p42 = por %p40, %p41
    %p44 = scmp.ne.s32.totalorder %s27, %s43
    %p45 = scmp.eq.s32.totalorder %s19, 0
    %p46 = por %p44, %p45
    %s48 = sadd.s32 %s47, 1
    %p51 = scmp.eq.s32.totalorder %s13, 1
    %p52 = scmp.ne.s32.totalorder %s47, %s49
    %p53 = scmp.eq.s32.totalorder %s13, 0
    %p54 = por %p52, %p53
    %p55 = scmp.ne.s32.totalorder %s47, %s49
    %p56 = scmp.eq.s32.totalorder %s18, 1
    %p57 = por %p55, %p56
    %p58 = scmp.ne.s32.totalorder %s49, %s50
    %p59 = scmp.eq.s32.totalorder %s18, 0
    %p60 = por %p58, %p59
    %p61 = scmp.ne.s32.totalorder %s49, %s50
    %p62 = scmp.eq.s32.totalorder %s19, 1
    %p63 = por %p61, %p62
    %p65 = scmp.ne.s32.totalorder %s50, %s64
    %p66 = scmp.eq.s32.totalorder %s19, 0
    %p67 = por %p65, %p66
    %s69 = sadd.s32 %s68, 1
    %p72 = scmp.eq.s32.totalorder %s13, 1
    %p73 = scmp.ne.s32.totalorder %s68, %s70
    %p74 = scmp.eq.s32.totalorder %s13, 0
    %p75 = por %p73, %p74
    %p76 = scmp.ne.s32.totalorder %s68, %s70
    %p77 = scmp.eq.s32.totalorder %s18, 1
    %p78 = por %p76, %p77
    %p79 = scmp.ne.s32.totalorder %s70, %s71
    %p80 = scmp.eq.s32.totalorder %s18, 0
    %p81 = por %p79, %p80
    %p82 = scmp.ne.s32.totalorder %s70, %s71
    %p83 = scmp.eq.s32.totalorder %s19, 1
    %p84 = por %p82, %p83
    %p86 = scmp.ne.s32.totalorder %s71, %s85
    %p87 = scmp.eq.s32.totalorder %s19, 0
    %p88 = por %p86, %p87
    %s90 = sadd.s32 %s89, 1
    %p93 = scmp.eq.s32.totalorder %s13, 1
    %p94 = scmp.ne.s32.totalorder %s89, %s91
    %p95 = scmp.eq.s32.totalorder %s13, 0
    %p96 = por %p94, %p95
    %p97 = scmp.ne.s32.totalorder %s89, %s91
    %p98 = scmp.eq.s32.totalorder %s18, 1
    %p99 = por %p97, %p98
    %p100 = scmp.ne.s32.totalorder %s91, %s92
    %p101 = scmp.eq.s32.totalorder %s18, 0
    %p102 = por %p100, %p101
    %p103 = scmp.ne.s32.totalorder %s91, %s92
    %p104 = scmp.eq.s32.totalorder %s19, 1
    %p105 = por %p103, %p104
    %p107 = scmp.ne.s32.totalorder %s92, %s106
    %p108 = scmp.eq.s32.totalorder %s19, 0
    %p109 = por %p107, %p108
    %s111 = sadd.s32 %s110, 1
    %p114 = scmp.eq.s32.totalorder %s13, 1
    %p115 = scmp.ne.s32.totalorder %s110, %s112
    %p116 = scmp.eq.s32.totalorder %s13, 0
    %p117 = por %p115, %p116
    %p118 = scmp.ne.s32.totalorder %s110, %s112
    %p119 = scmp.eq.s32.totalorder %s18, 1
    %p120 = por %p118, %p119
    %p121 = scmp.ne.s32.totalorder %s112, %s113
    %p122 = scmp.eq.s32.totalorder %s18, 0
    %p123 = por %p121, %p122
    %p124 = scmp.ne.s32.totalorder %s112, %s113
    %p125 = scmp.eq.s32.totalorder %s19, 1
    %p126 = por %p124, %p125
    %p128 = scmp.ne.s32.totalorder %s113, %s127
    %p129 = scmp.eq.s32.totalorder %s19, 0
    %p130 = por %p128, %p129
    %s132 = sadd.s32 %s131, 1
    %p135 = scmp.eq.s32.totalorder %s13, 1
    %p136 = scmp.ne.s32.totalorder %s131, %s133
    %p137 = scmp.eq.s32.totalorder %s13, 0
    %p138 = por %p136, %p137
    %p139 = scmp.ne.s32.totalorder %s131, %s133
    %p140 = scmp.eq.s32.totalorder %s18, 1
    %p141 = por %p139, %p140
    %p142 = scmp.ne.s32.totalorder %s133, %s134
    %p143 = scmp.eq.s32.totalorder %s18, 0
    %p144 = por %p142, %p143
    %p145 = scmp.ne.s32.totalorder %s133, %s134
    %p146 = scmp.eq.s32.totalorder %s19, 1
    %p147 = por %p145, %p146
    %p149 = scmp.ne.s32.totalorder %s134, %s148
    %p150 = scmp.eq.s32.totalorder %s19, 0
    %p151 = por %p149, %p150
    %s153 = sadd.s32 %s152, 1
    %p156 = scmp.eq.s32.totalorder %s13, 1
    %p157 = scmp.ne.s32.totalorder %s152, %s154
    %p158 = scmp.eq.s32.totalorder %s13, 0
    %p159 = por %p157, %p158
    %p160 = scmp.ne.s32.totalorder %s152, %s154
    %p161 = scmp.eq.s32.totalorder %s18, 1
    %p162 = por %p160, %p161
    %p163 = scmp.ne.s32.totalorder %s154, %s155
    %p164 = scmp.eq.s32.totalorder %s18, 0
    %p165 = por %p163, %p164
    %p166 = scmp.ne.s32.totalorder %s154, %s155
    %p167 = scmp.eq.s32.totalorder %s19, 1
    %p168 = por %p166, %p167
    %p170 = scmp.ne.s32.totalorder %s155, %s169
    %p171 = scmp.eq.s32.totalorder %s19, 0
    %p172 = por %p170, %p171
    %s173 = ssub.s32 %s13, %s20
    %p174 = scmp.eq.s32.totalorder %s173, 0
    %s176 = sadd.s32 %s175, 1
    %s177 = scalar_select %p174, %s175, %s176
    %p180 = pneg %p174
    %p181 = scmp.eq.s32.totalorder %s13, 1
    %p182 = por %p180, %p181
    %p183 = scmp.ne.s32.totalorder %s175, %s178
    %p184 = scmp.eq.s32.totalorder %s13, 0
    %p185 = por %p183, %p184
    %p186 = scmp.ne.s32.totalorder %s175, %s178
    %p187 = scmp.eq.s32.totalorder %s18, 1
    %p188 = por %p186, %p187
    %p189 = scmp.ne.s32.totalorder %s178, %s179
    %p190 = scmp.eq.s32.totalorder %s18, 0
    %p191 = por %p189, %p190
    %p192 = scmp.ne.s32.totalorder %s178, %s179
    %p193 = scmp.eq.s32.totalorder %s19, 1
    %p194 = por %p192, %p193
    %p196 = scmp.ne.s32.totalorder %s179, %s195
    %p197 = scmp.eq.s32.totalorder %s19, 0
    %p198 = por %p196, %p197
    %p199 = scmp.le.s32.totalorder 1, %s13
    %p200 = scmp.lt.s32.totalorder %s13, 3
    %p201 = pnand %p199, %p200
    %p202 = pneg %p201
    // Predicated region
    $region9: #{modifier_forward.6} parent=5 // pred_check
      _
    $region10: #{modifier_forward.6} parent=5 // pred_check_branch
      %204 = sbr.rel (%p201) target = $region12
    $region11: #{modifier_forward.6} parent=5 // pred_region
      %s205 = ssub.s32 %s13, 1
      // Predicated region
      $region13: #{modifier_forward.6} parent=11 // pred_check
        %p206 = pneg %p60
      $region14: #{modifier_forward.6} parent=11 // pred_check_branch
        %208 = sbr.rel (%p206) target = $region16
      $region15: #{modifier_forward.6} parent=11 // pred_region
        _
      $region16: #{modifier_forward.6} parent=11 // pred_fallthru
        _
      // Predicated region
      $region17: #{modifier_forward.6} parent=11 // pred_check
        %p209 = pneg %p81
      $region18: #{modifier_forward.6} parent=11 // pred_check_branch
        %211 = sbr.rel (%p209) target = $region20
      $region19: #{modifier_forward.6} parent=11 // pred_region
        _
      $region20: #{modifier_forward.6} parent=11 // pred_fallthru
        _
      // Predicated region
      $region21: #{modifier_forward.6} parent=11 // pred_check
        %p212 = pneg %p102
      $region22: #{modifier_forward.6} parent=11 // pred_check_branch
        %214 = sbr.rel (%p212) target = $region24
      $region23: #{modifier_forward.6} parent=11 // pred_region
        _
      $region24: #{modifier_forward.6} parent=11 // pred_fallthru
        _
      // Predicated region
      $region25: #{modifier_forward.6} parent=11 // pred_check
        %p215 = pneg %p123
      $region26: #{modifier_forward.6} parent=11 // pred_check_branch
        %217 = sbr.rel (%p215) target = $region28
      $region27: #{modifier_forward.6} parent=11 // pred_region
        _
      $region28: #{modifier_forward.6} parent=11 // pred_fallthru
        _
      // Predicated region
      $region29: #{modifier_forward.6} parent=11 // pred_check
        %p218 = pneg %p144
      $region30: #{modifier_forward.6} parent=11 // pred_check_branch
        %220 = sbr.rel (%p218) target = $region32
      $region31: #{modifier_forward.6} parent=11 // pred_region
        _
      $region32: #{modifier_forward.6} parent=11 // pred_fallthru
        _
      // Predicated region
      $region33: #{modifier_forward.6} parent=11 // pred_check
        %p221 = pneg %p165
      $region34: #{modifier_forward.6} parent=11 // pred_check_branch
        %223 = sbr.rel (%p221) target = $region36
      $region35: #{modifier_forward.6} parent=11 // pred_region
        _
      $region36: #{modifier_forward.6} parent=11 // pred_fallthru
        _
    $region12: #{modifier_forward.6} parent=5 // pred_fallthru
      _
    %p224 = scmp.lt.s32.totalorder %s13, 2
    // Predicated region
    $region37: #{modifier_forward.6} parent=5 // pred_check
      %p225 = pneg %p224
    $region38: #{modifier_forward.6} parent=5 // pred_check_branch
      %227 = sbr.rel (%p225) target = $region40
    $region39: #{modifier_forward.6} parent=5 // pred_region
      // Predicated region
      $region41: #{modifier_forward.6} parent=39 // pred_check
        %p228 = pneg %p33
      $region42: #{modifier_forward.6} parent=39 // pred_check_branch
        %230 = sbr.rel (%p228) target = $region44
      $region43: #{modifier_forward.6} parent=39 // pred_region
        %p231 = scmp.lt.s32.totalorder %s13, 1
        %s232 = scalar_select %p231, %s13, 1
        %s233 = smul.addr %s232, 2
        %s234 = smul.addr %s233, 4
        %s235 = scalar_lea.vmem %s0, %s234
      $region44: #{modifier_forward.6} parent=39 // pred_fallthru
        _
    $region40: #{modifier_forward.6} parent=5 // pred_fallthru
      _
    %p236 = scmp.le.s32.totalorder 1, %s13
    %p237 = scmp.lt.s32.totalorder %s13, 3
    %p238 = pnand %p236, %p237
    %p239 = pneg %p238
    // Predicated region
    $region45: #{modifier_forward.6} parent=5 // pred_check
      _
    $region46: #{modifier_forward.6} parent=5 // pred_check_branch
      %241 = sbr.rel (%p238) target = $region48
    $region47: #{modifier_forward.6} parent=5 // pred_region
      %s242 = ssub.s32 %s13, 1
      %p243 = scmp.lt.s32.totalorder %s18, 1
      %s244 = scalar_select %p243, %s18, 1
      %s245 = smul.addr %s244, 2
      %s246 = smul.addr %s245, 4
      %s247 = scalar_lea.vmem %s0, %s246
      %p248 = pneg %p39
      %p249 = pneg %p36
      %p250 = pneg %p60
      %p251 = pneg %p57
      %p252 = pneg %p81
      %p253 = pneg %p78
      %p254 = pneg %p102
      %p255 = pneg %p99
      %p256 = pneg %p123
      %p257 = pneg %p120
      %p258 = pneg %p144
      %p259 = pneg %p141
      %p260 = pneg %p165
      %p261 = pneg %p162
      %p262 = pneg %p191
      %p263 = pneg %p188
      %p264 = scmp.lt.s32.totalorder %s18, 1
      %s265 = scalar_select %p264, %s18, 1
      %s266 = smul.addr %s265, 2
      %s267 = smul.addr %s266, 8
      %s268 = scalar_lea.vmem %s7, %s267
      %p269 = scmp.lt.s32.totalorder %s18, 1
      %s270 = scalar_select %p269, %s18, 1
      %s271 = smul.addr %s270, 2
      %s272 = smul.addr %s271, 4
      %s273 = scalar_lea.vmem %s0, %s272
      %p274 = scmp.lt.s32.totalorder %s18, 1
      %s275 = scalar_select %p274, %s18, 1
      %s276 = smul.addr %s275, 2
      %s277 = smul.addr %s276, 8
      %s278 = scalar_lea.vmem %s7, %s277
      %v280 = vld [vmem:[%s273] sm:$0xf]
      %v281 = vld [vmem:[%s273 + $0x4] sm:$0xf]
      %v282 = vld [vmem:[%s1] sm:$0xf]
      %v283 = vld [vmem:[%s1 + $0x4] sm:$0xf]
      %v284 = vld [vmem:[%s1 + $0x8] sm:$0x1]
      %v285 = vld [vmem:[%s2] sm:$0x1]
      %v287 = vperm.slane %v285, 0
      %v291 = vunpack.c.l.b16 %v280
      %v292 = vunpack.c.l.b16 %v281
      %v293 = vpack.c.b16 %v292, %v291
      %v297 = vunpack.c.l.b16 %v282
      %v298 = vunpack.c.l.b16 %v283
      %v299 = vunpack.c.l.b16 %v284
      %v300 = vpack.c.b16 %v298, %v297
      %v301 = vpack.c.b16 %v299, %v299
      %vm303 = vcmask 146432
      %v305 = vsel %vm303, %v293, 0
      %vm307 = vcmask 1040384
      %v309 = vsel %vm307, %v301, 0
      %311 = vmatpush.bf16.msra.mxu0 0
      %312 = vmatpush.bf16.msra.mxu0 0
      %313 = vmatpush.bf16.msra.mxu0 0
      %314 = vmatpush.bf16.msra.mxu0 0
      %315 = vmatpush.bf16.msra.mxu0 0
      %316 = vmatpush.bf16.msra.mxu0 0
      %317 = vmatpush.bf16.msra.mxu0 %v309
      %318 = vmatpush.bf16.msra.mxu0 %v300
      %319 = vmatmul.bf16.gmra.mxu0 %v305
      %v320 = vpop.f32.mrf.mxu0
      %v321 = vadd.f32 %v287, %v320
      %v322 = vpop.f32.mrf.mxu0
      %v323 = vadd.f32 %v287, %v322
      %324 = vdwg.mxu0
      %vm325 = vcmp.gt.f32.partialorder %v321, 0.0
      %vm326 = vcmp.gt.f32.partialorder %v323, 0.0
      %v327 = vmin.f32 %v321, 0.0
      %v328 = vmin.f32 %v323, 0.0
      %v329 = vmul.f32 %v327, 1.442695
      %v330 = vpow.pop %v329
      %v331 = vmul.f32 %v328, 1.442695
      %v332 = vpow.pop %v331
      %v333 = vsub.f32 %v330, 1.0
      %v334 = vsub.f32 %v332, 1.0
      %v335 = vsel %vm325, %v321, %v333
      %v336 = vsel %vm326, %v323, %v334
      %vm337 = vcmask 261120
      %v338 = vsel %vm337, %v335, 0.0
      %v339 = vsel %vm337, %v336, 0.0
      %v340 = vadd.f32 %v338, %v339
      %v341 = vrot.slane %v340, 4
      %v342 = vadd.f32 %v340, %v341
      %v343 = vrot.slane %v342, 2
      %v344 = vadd.f32 %v342, %v343
      %v345 = vrot.slane %v344, 1
      %v346 = vadd.f32 %v344, %v345
      %v347 = vrcp.pop 16.0
      %v348 = vmul.f32 16.0, %v347
      %v349 = vsub.f32 1.0, %v348
      %v350 = vmul.f32 %v347, %v349
      %v351 = vadd.f32 %v347, %v350
      %vm352 = vweird.f32 %v347
      %v353 = vsel %vm352, %v347, %v351
      %v354 = vmul.f32 %v346, %v353
      %v355 = vsub.f32 %v335, %v354
      %v356 = vsub.f32 %v336, %v354
      %v357 = vmul.f32 %v355, %v355
      %v358 = vmul.f32 %v356, %v356
      %v359 = vsel %vm337, %v357, 0.0
      %v360 = vsel %vm337, %v358, 0.0
      %v361 = vadd.f32 %v359, %v360
      %v362 = vrot.slane %v361, 4
      %v363 = vadd.f32 %v361, %v362
      %v364 = vrot.slane %v363, 2
      %v365 = vadd.f32 %v363, %v364
      %v366 = vrot.slane %v365, 1
      %v367 = vadd.f32 %v365, %v366
      %v368 = vmul.f32 %v367, %v353
      %v369 = vadd.f32 %v368, 1e-05
      %v370 = vrsqrt.pop %v369
      %v371 = vmul.f32 %v370, %v369
      %v372 = vmul.f32 %v371, %v370
      %v373 = vmul.f32 0.5, %v372
      %v374 = vsub.f32 1.5, %v373
      %v375 = vmul.f32 %v370, %v374
      %vm376 = vweird.f32 %v369
      %vm377 = vweird.f32 %v370
      %vm378 = vmor %vm376, %vm377
      %v379 = vsel %vm378, %v370, %v375
      %v380 = vmul.f32 %v355, %v379
      %v381 = vmul.f32 %v356, %v379
      %382 = vst.msk [vmem:[#allocation2] sm:$0xff] %vm337, 0.0
      %383 = vst.msk [vmem:[#allocation2 + $0x8] sm:$0xff] %vm337, 0.0
      %vm384 = vcmask 257024
      %385 = vst.msk [vmem:[#allocation2 + $0x10] sm:$0xf] %vm384, 0.0
      %386 = vst.msk [vmem:[#allocation2 + $0x2] sm:$0xff] %vm337, %v380
      %387 = vst.msk [vmem:[#allocation2 + $0xa] sm:$0xff] %vm337, %v381
      %v388 = vld [vmem:[#allocation2] sm:$0xff]
      %v389 = vld [vmem:[#allocation2 + $0x8] sm:$0xff]
      %v390 = vpack.c.bf16 %v389, %v388
      %v391 = vld [vmem:[%s3] sm:$0xf]
      %v392 = vld [vmem:[%s3 + $0x4] sm:$0xf]
      %v393 = vld [vmem:[%s3 + $0x8] sm:$0xf]
      %v394 = vld [vmem:[%s3 + $0xc] sm:$0xf]
      %v395 = vld [vmem:[#allocation2 + $0x2] sm:$0xff]
      %v396 = vld [vmem:[#allocation2 + $0xa] sm:$0xff]
      %v397 = vpack.c.bf16 %v396, %v395
      %s398 = scalar_lea.vmem %s3, 16
      %v399 = vld [vmem:[%s398] sm:$0xf]
      %v400 = vld [vmem:[%s398 + $0x4] sm:$0xf]
      %v401 = vld [vmem:[%s398 + $0x8] sm:$0xf]
      %v402 = vld [vmem:[%s398 + $0xc] sm:$0xf]
      %v407 = vunpack.c.l.b16 %v399
      %v408 = vunpack.c.l.b16 %v400
      %v409 = vunpack.c.l.b16 %v401
      %v410 = vunpack.c.l.b16 %v402
      %v411 = vpack.c.b16 %v408, %v407
      %v412 = vpack.c.b16 %v410, %v409
      %v416 = vsel %vm337, %v397, 0
      %418 = vmatpush.bf16.msra.mxu0 0
      %419 = vmatpush.bf16.msra.mxu0 0
      %420 = vmatpush.bf16.msra.mxu0 0
      %421 = vmatpush.bf16.msra.mxu0 0
      %422 = vmatpush.bf16.msra.mxu0 0
      %423 = vmatpush.bf16.msra.mxu0 0
      %424 = vmatpush.bf16.msra.mxu0 %v412
      %425 = vmatpush.bf16.msra.mxu0 %v411
      %426 = vmatmul.bf16.gmra.mxu0 %v416
      %v427 = vpop.f32.mrf.mxu0
      %v428 = vadd.f32 0.0, %v427
      %v429 = vpop.f32.mrf.mxu0
      %v430 = vadd.f32 0.0, %v429
      %431 = vdwg.mxu0
      %v436 = vunpack.c.l.b16 %v391
      %v437 = vunpack.c.l.b16 %v392
      %v438 = vunpack.c.l.b16 %v393
      %v439 = vunpack.c.l.b16 %v394
      %v440 = vpack.c.b16 %v437, %v436
      %v441 = vpack.c.b16 %v439, %v438
      %v445 = vsel %vm337, %v390, 0
      %447 = vmatpush.bf16.msra.mxu0 0
      %448 = vmatpush.bf16.msra.mxu0 0
      %449 = vmatpush.bf16.msra.mxu0 0
      %450 = vmatpush.bf16.msra.mxu0 0
      %451 = vmatpush.bf16.msra.mxu0 0
      %452 = vmatpush.bf16.msra.mxu0 0
      %453 = vmatpush.bf16.msra.mxu0 %v441
      %454 = vmatpush.bf16.msra.mxu0 %v440
      %455 = vmatmul.bf16.gmra.mxu0 %v445
      %v456 = vpop.f32.mrf.mxu0
      %v457 = vadd.f32 %v428, %v456
      %v458 = vpop.f32.mrf.mxu0
      %v459 = vadd.f32 %v430, %v458
      %460 = vdwg.mxu0
      %v461 = vld [vmem:[#allocation2 + $0x4] sm:$0xff]
      %v462 = vld [vmem:[#allocation2 + $0xc] sm:$0xff]
      %v463 = vpack.c.bf16 %v462, %v461
      %s464 = scalar_lea.vmem %s3, 32
      %v465 = vld [vmem:[%s464] sm:$0xf]
      %v466 = vld [vmem:[%s464 + $0x4] sm:$0xf]
      %v467 = vld [vmem:[%s464 + $0x8] sm:$0xf]
      %v468 = vld [vmem:[%s464 + $0xc] sm:$0xf]
      %v473 = vunpack.c.l.b16 %v465
      %v474 = vunpack.c.l.b16 %v466
      %v475 = vunpack.c.l.b16 %v467
      %v476 = vunpack.c.l.b16 %v468
      %v477 = vpack.c.b16 %v474, %v473
      %v478 = vpack.c.b16 %v476, %v475
      %v482 = vsel %vm337, %v463, 0
      %484 = vmatpush.bf16.msra.mxu0 0
      %485 = vmatpush.bf16.msra.mxu0 0
      %486 = vmatpush.bf16.msra.mxu0 0
      %487 = vmatpush.bf16.msra.mxu0 0
      %488 = vmatpush.bf16.msra.mxu0 0
      %489 = vmatpush.bf16.msra.mxu0 0
      %490 = vmatpush.bf16.msra.mxu0 %v478
      %491 = vmatpush.bf16.msra.mxu0 %v477
      %492 = vmatmul.bf16.gmra.mxu0 %v482
      %v493 = vpop.f32.mrf.mxu0
      %v494 = vadd.f32 0.0, %v493
      %v495 = vpop.f32.mrf.mxu0
      %v496 = vadd.f32 0.0, %v495
      %497 = vdwg.mxu0
      %v498 = vadd.f32 %v457, %v494
      %v499 = vadd.f32 %v459, %v496
      %v500 = vld [vmem:[%s4] sm:$0x1]
      %v502 = vperm.slane %v500, 0
      %v504 = vadd.f32 %v498, %v502
      %v505 = vadd.f32 %v499, %v502
      %v506 = vadd.f32 %v504, %v335
      %v507 = vadd.f32 %v505, %v336
      %vm508 = vcmp.gt.f32.partialorder %v506, 0.0
      %vm509 = vcmp.gt.f32.partialorder %v507, 0.0
      %v510 = vmin.f32 %v506, 0.0
      %v511 = vmin.f32 %v507, 0.0
      %v512 = vmul.f32 %v510, 1.442695
      %v513 = vpow.pop %v512
      %v514 = vmul.f32 %v511, 1.442695
      %v515 = vpow.pop %v514
      %v516 = vsub.f32 %v513, 1.0
      %v517 = vsub.f32 %v515, 1.0
      %v518 = vsel %vm508, %v506, %v516
      %v519 = vsel %vm509, %v507, %v517
      %v520 = vpack.c.bf16 %v519, %v518
      %v521 = vld [vmem:[%s5] sm:$0xf]
      %v522 = vld [vmem:[%s5 + $0x4] sm:$0xf]
      %v523 = vld [vmem:[%s5 + $0x8] sm:$0xf]
      %v524 = vld [vmem:[%s5 + $0xc] sm:$0xf]
      %v525 = vld [vmem:[%s6] sm:$0x1]
      %v527 = vperm.slane %v525, 0
      %v533 = vunpack.c.l.b16 %v521
      %v534 = vunpack.c.l.b16 %v522
      %v535 = vunpack.c.l.b16 %v523
      %v536 = vunpack.c.l.b16 %v524
      %v537 = vpack.c.b16 %v534, %v533
      %v538 = vpack.c.b16 %v536, %v535
      %v542 = vsel %vm337, %v520, 0
      %544 = vmatpush.bf16.msra.mxu0 0
      %545 = vmatpush.bf16.msra.mxu0 0
      %546 = vmatpush.bf16.msra.mxu0 0
      %547 = vmatpush.bf16.msra.mxu0 0
      %548 = vmatpush.bf16.msra.mxu0 0
      %549 = vmatpush.bf16.msra.mxu0 0
      %550 = vmatpush.bf16.msra.mxu0 %v538
      %551 = vmatpush.bf16.msra.mxu0 %v537
      %552 = vmatmul.bf16.gmra.mxu0 %v542
      %v553 = vpop.f32.mrf.mxu0
      %v554 = vadd.f32 %v527, %v553
      %v555 = vpop.f32.mrf.mxu0
      %v556 = vadd.f32 %v527, %v555
      %557 = vdwg.mxu0
      %558 = vst.msk [vmem:[%s278] sm:$0xff] %vm337, %v554
      %559 = vst.msk [vmem:[%s278 + $0x8] sm:$0xff] %vm337, %v556
      %p560 = scmp.lt.s32.totalorder %s18, 1
      %s561 = scalar_select %p560, %s18, 1
      %s562 = smul.addr %s561, 2
      %s563 = smul.addr %s562, 8
      %s564 = scalar_lea.vmem %s7, %s563
      // Predicated region
      $region49: #{modifier_forward.6} parent=47 // pred_check
        %p565 = pneg %p188
      $region50: #{modifier_forward.6} parent=47 // pred_check_branch
        %567 = sbr.rel (%p565) target = $region52
      $region51: #{modifier_forward.6} parent=47 // pred_region
        _
      $region52: #{modifier_forward.6} parent=47 // pred_fallthru
        _
    $region48: #{modifier_forward.6} parent=5 // pred_fallthru
      _
    %p568 = scmp.le.s32.totalorder 2, %s13
    // Predicated region
    $region53: #{modifier_forward.6} parent=5 // pred_check
      %p569 = pneg %p568
    $region54: #{modifier_forward.6} parent=5 // pred_check_branch
      %571 = sbr.rel (%p569) target = $region56
    $region55: #{modifier_forward.6} parent=5 // pred_region
      %s572 = ssub.s32 %s13, 2
      // Predicated region
      $region57: #{modifier_forward.6} parent=55 // pred_check
        %p573 = pneg %p194
      $region58: #{modifier_forward.6} parent=55 // pred_check_branch
        %575 = sbr.rel (%p573) target = $region60
      $region59: #{modifier_forward.6} parent=55 // pred_region
        %p576 = scmp.lt.s32.totalorder %s19, 1
        %s577 = scalar_select %p576, %s19, 1
        %s578 = smul.addr %s577, 2
        %s579 = smul.addr %s578, 8
        %s580 = scalar_lea.vmem %s7, %s579
      $region60: #{modifier_forward.6} parent=55 // pred_fallthru
        _
    $region56: #{modifier_forward.6} parent=5 // pred_fallthru
      _
  $region6: #{modifier_forward.6} parent=0 // loop_footer
    %s17 = sadd.s32 1, %s13
  $region7: #{modifier_forward.6} parent=0 // loop_footer_branch
    %12 = sbr.rel target = $region3
  $region8: #{modifier_forward.6} parent=0 // loop_exit
    _

// kernel: modifier_forward.7
$region0: #{modifier_forward.7}
  #allocation0 [shape = 'u32[]', space=smem, size = 0x4, offset = 0x4, fixed_abs, tag = 'smem constant byte address 0x4 - core index']
  #allocation1 [shape = 'u32[72,128]{1,0:T(1,128)}', space=vmem, size = 0x9000, scoped, tag = 'internal scratch']
  %s0 = inlined_call_operand.vmem [shape: bf16[256,32], index: 0, kind: input, shape index: {}]
  %s1 = inlined_call_operand.vmem [shape: bf16[256,32], index: 1, kind: input, shape index: {}]
  %s2 = inlined_call_operand.vmem [shape: f32[32,32], index: 2, kind: input, shape index: {}]
  %s3 = inlined_call_operand.vmem [shape: bf16[32,256], index: 3, kind: input, shape index: {}]
  %s4 = inlined_call_operand.vmem [shape: bf16[32,32], index: 4, kind: input, shape index: {}]
  %s5 = inlined_call_operand.vmem [shape: bf16[32,32], index: 5, kind: input, shape index: {}]
  %s6 = inlined_call_operand.vmem [shape: f32[1,32], index: 6, kind: input, shape index: {}]
  %s7 = inlined_call_operand.vmem [shape: bf16[32,128], index: 7, kind: input, shape index: {}]
  %s8 = inlined_call_operand.vmem [shape: f32[1,128], index: 8, kind: input, shape index: {}]
  %s9 = inlined_call_operand.vmem [shape: bf16[128,128], index: 9, kind: input, shape index: {}]
  %s10 = inlined_call_operand.vmem [shape: f32[1,128], index: 10, kind: input, shape index: {}]
  %s11 = inlined_call_operand.vmem [shape: bf16[128,32], index: 11, kind: input, shape index: {}]
  %s12 = inlined_call_operand.vmem [shape: f32[1,32], index: 12, kind: input, shape index: {}]
  %s13 = inlined_call_operand.vmem [shape: f32[32,32], index: 13, kind: output, shape index: {}]
  %s14 = sld [smem:[#allocation0]]
  $region62: #{modifier_forward.7} parent=0
    _
  %s16 = ssub.s32 1, %s14
  %s17 = scalar_select 0, %s16, %s14
  // Predicated region
  $region2: #{modifier_forward.7} parent=0 // pred_check
    _
  $region3: #{modifier_forward.7} parent=0 // pred_check_branch
    %19 = sbr.rel (0) target = $region5
  $region4: #{modifier_forward.7} parent=0 // pred_region
    _
  $region5: #{modifier_forward.7} parent=0 // pred_fallthru
    _
  // Predicated region
  $region6: #{modifier_forward.7} parent=0 // pred_check
    _
  $region7: #{modifier_forward.7} parent=0 // pred_check_branch
    %21 = sbr.rel (0) target = $region9
  $region8: #{modifier_forward.7} parent=0 // pred_region
    _
  $region9: #{modifier_forward.7} parent=0 // pred_fallthru
    _
  // Predicated region
  $region10: #{modifier_forward.7} parent=0 // pred_check
    _
  $region11: #{modifier_forward.7} parent=0 // pred_check_branch
    %23 = sbr.rel (0) target = $region13
  $region12: #{modifier_forward.7} parent=0 // pred_region
    _
  $region13: #{modifier_forward.7} parent=0 // pred_fallthru
    _
  // Predicated region
  $region14: #{modifier_forward.7} parent=0 // pred_check
    _
  $region15: #{modifier_forward.7} parent=0 // pred_check_branch
    %25 = sbr.rel (0) target = $region17
  $region16: #{modifier_forward.7} parent=0 // pred_region
    _
  $region17: #{modifier_forward.7} parent=0 // pred_fallthru
    _
  // Predicated region
  $region18: #{modifier_forward.7} parent=0 // pred_check
    _
  $region19: #{modifier_forward.7} parent=0 // pred_check_branch
    %27 = sbr.rel (0) target = $region21
  $region20: #{modifier_forward.7} parent=0 // pred_region
    _
  $region21: #{modifier_forward.7} parent=0 // pred_fallthru
    _
  // Predicated region
  $region22: #{modifier_forward.7} parent=0 // pred_check
    _
  $region23: #{modifier_forward.7} parent=0 // pred_check_branch
    %29 = sbr.rel (0) target = $region25
  $region24: #{modifier_forward.7} parent=0 // pred_region
    _
  $region25: #{modifier_forward.7} parent=0 // pred_fallthru
    _
  // Predicated region
  $region26: #{modifier_forward.7} parent=0 // pred_check
    _
  $region27: #{modifier_forward.7} parent=0 // pred_check_branch
    %31 = sbr.rel (0) target = $region29
  $region28: #{modifier_forward.7} parent=0 // pred_region
    _
  $region29: #{modifier_forward.7} parent=0 // pred_fallthru
    _
  // Predicated region
  $region30: #{modifier_forward.7} parent=0 // pred_check
    _
  $region31: #{modifier_forward.7} parent=0 // pred_check_branch
    %33 = sbr.rel (0) target = $region33
  $region32: #{modifier_forward.7} parent=0 // pred_region
    _
  $region33: #{modifier_forward.7} parent=0 // pred_fallthru
    _
  // Predicated region
  $region34: #{modifier_forward.7} parent=0 // pred_check
    _
  $region35: #{modifier_forward.7} parent=0 // pred_check_branch
    %35 = sbr.rel (0) target = $region37
  $region36: #{modifier_forward.7} parent=0 // pred_region
    _
  $region37: #{modifier_forward.7} parent=0 // pred_fallthru
    _
  // Predicated region
  $region38: #{modifier_forward.7} parent=0 // pred_check
    _
  $region39: #{modifier_forward.7} parent=0 // pred_check_branch
    %37 = sbr.rel (0) target = $region41
  $region40: #{modifier_forward.7} parent=0 // pred_region
    _
  $region41: #{modifier_forward.7} parent=0 // pred_fallthru
    _
  // Predicated region
  $region42: #{modifier_forward.7} parent=0 // pred_check
    _
  $region43: #{modifier_forward.7} parent=0 // pred_check_branch
    %39 = sbr.rel (0) target = $region45
  $region44: #{modifier_forward.7} parent=0 // pred_region
    _
  $region45: #{modifier_forward.7} parent=0 // pred_fallthru
    _
  // Predicated region
  $region46: #{modifier_forward.7} parent=0 // pred_check
    _
  $region47: #{modifier_forward.7} parent=0 // pred_check_branch
    %41 = sbr.rel (0) target = $region49
  $region48: #{modifier_forward.7} parent=0 // pred_region
    _
  $region49: #{modifier_forward.7} parent=0 // pred_fallthru
    _
  // Predicated region
  $region50: #{modifier_forward.7} parent=0 // pred_check
    _
  $region51: #{modifier_forward.7} parent=0 // pred_check_branch
    %43 = sbr.rel (0) target = $region53
  $region52: #{modifier_forward.7} parent=0 // pred_region
    _
  $region53: #{modifier_forward.7} parent=0 // pred_fallthru
    _
  %v45 = vld [vmem:[%s0] sm:$0xf]
  %v46 = vld [vmem:[%s0 + $0x4] sm:$0xf]
  %v47 = vld [vmem:[%s0 + $0x8] sm:$0xf]
  %v48 = vld [vmem:[%s0 + $0xc] sm:$0xf]
  %v49 = vld [vmem:[%s0 + $0x10] sm:$0xf]
  %v50 = vld [vmem:[%s0 + $0x14] sm:$0xf]
  %v51 = vld [vmem:[%s0 + $0x18] sm:$0xf]
  %v52 = vld [vmem:[%s0 + $0x1c] sm:$0xf]
  %v53 = vld [vmem:[%s0 + $0x20] sm:$0xf]
  %v54 = vld [vmem:[%s0 + $0x24] sm:$0xf]
  %v55 = vld [vmem:[%s0 + $0x28] sm:$0xf]
  %v56 = vld [vmem:[%s0 + $0x2c] sm:$0xf]
  %v57 = vld [vmem:[%s0 + $0x30] sm:$0xf]
  %v58 = vld [vmem:[%s0 + $0x34] sm:$0xf]
  %v59 = vld [vmem:[%s0 + $0x38] sm:$0xf]
  %v60 = vld [vmem:[%s0 + $0x3c] sm:$0xf]
  %v61 = vld [vmem:[%s0 + $0x40] sm:$0xf]
  %v62 = vld [vmem:[%s0 + $0x44] sm:$0xf]
  %v63 = vld [vmem:[%s0 + $0x48] sm:$0xf]
  %v64 = vld [vmem:[%s0 + $0x4c] sm:$0xf]
  %v65 = vld [vmem:[%s0 + $0x50] sm:$0xf]
  %v66 = vld [vmem:[%s0 + $0x54] sm:$0xf]
  %v67 = vld [vmem:[%s0 + $0x58] sm:$0xf]
  %v68 = vld [vmem:[%s0 + $0x5c] sm:$0xf]
  %v69 = vld [vmem:[%s0 + $0x60] sm:$0xf]
  %v70 = vld [vmem:[%s0 + $0x64] sm:$0xf]
  %v71 = vld [vmem:[%s0 + $0x68] sm:$0xf]
  %v72 = vld [vmem:[%s0 + $0x6c] sm:$0xf]
  %v73 = vld [vmem:[%s0 + $0x70] sm:$0xf]
  %v74 = vld [vmem:[%s0 + $0x74] sm:$0xf]
  %v75 = vld [vmem:[%s0 + $0x78] sm:$0xf]
  %v76 = vld [vmem:[%s0 + $0x7c] sm:$0xf]
  %v77 = vld [vmem:[%s4] sm:$0xf]
  %v78 = vld [vmem:[%s4 + $0x4] sm:$0xf]
  %v79 = vld [vmem:[%s4 + $0x8] sm:$0xf]
  %v80 = vld [vmem:[%s4 + $0xc] sm:$0xf]
  %v81 = vld [vmem:[%s1] sm:$0xf]
  %v82 = vld [vmem:[%s1 + $0x4] sm:$0xf]
  %v83 = vld [vmem:[%s1 + $0x8] sm:$0xf]
  %v84 = vld [vmem:[%s1 + $0xc] sm:$0xf]
  %v85 = vld [vmem:[%s1 + $0x10] sm:$0xf]
  %v86 = vld [vmem:[%s1 + $0x14] sm:$0xf]
  %v87 = vld [vmem:[%s1 + $0x18] sm:$0xf]
  %v88 = vld [vmem:[%s1 + $0x1c] sm:$0xf]
  %v89 = vld [vmem:[%s1 + $0x20] sm:$0xf]
  %v90 = vld [vmem:[%s1 + $0x24] sm:$0xf]
  %v91 = vld [vmem:[%s1 + $0x28] sm:$0xf]
  %v92 = vld [vmem:[%s1 + $0x2c] sm:$0xf]
  %v93 = vld [vmem:[%s1 + $0x30] sm:$0xf]
  %v94 = vld [vmem:[%s1 + $0x34] sm:$0xf]
  %v95 = vld [vmem:[%s1 + $0x38] sm:$0xf]
  %v96 = vld [vmem:[%s1 + $0x3c] sm:$0xf]
  %v97 = vld [vmem:[%s1 + $0x40] sm:$0xf]
  %v98 = vld [vmem:[%s1 + $0x44] sm:$0xf]
  %v99 = vld [vmem:[%s1 + $0x48] sm:$0xf]
  %v100 = vld [vmem:[%s1 + $0x4c] sm:$0xf]
  %v101 = vld [vmem:[%s1 + $0x50] sm:$0xf]
  %v102 = vld [vmem:[%s1 + $0x54] sm:$0xf]
  %v103 = vld [vmem:[%s1 + $0x58] sm:$0xf]
  %v104 = vld [vmem:[%s1 + $0x5c] sm:$0xf]
  %v105 = vld [vmem:[%s1 + $0x60] sm:$0xf]
  %v106 = vld [vmem:[%s1 + $0x64] sm:$0xf]
  %v107 = vld [vmem:[%s1 + $0x68] sm:$0xf]
  %v108 = vld [vmem:[%s1 + $0x6c] sm:$0xf]
  %v109 = vld [vmem:[%s1 + $0x70] sm:$0xf]
  %v110 = vld [vmem:[%s1 + $0x74] sm:$0xf]
  %v111 = vld [vmem:[%s1 + $0x78] sm:$0xf]
  %v112 = vld [vmem:[%s1 + $0x7c] sm:$0xf]
  %v113 = vld [vmem:[%s5] sm:$0xf]
  %v114 = vld [vmem:[%s5 + $0x4] sm:$0xf]
  %v115 = vld [vmem:[%s5 + $0x8] sm:$0xf]
  %v116 = vld [vmem:[%s5 + $0xc] sm:$0xf]
  %v149 = vunpack.c.l.b16 %v81
  %v150 = vunpack.c.l.b16 %v82
  %v151 = vunpack.c.l.b16 %v83
  %v152 = vunpack.c.l.b16 %v84
  %v153 = vunpack.c.l.b16 %v85
  %v154 = vunpack.c.l.b16 %v86
  %v155 = vunpack.c.l.b16 %v87
  %v156 = vunpack.c.l.b16 %v88
  %v157 = vunpack.c.l.b16 %v89
  %v158 = vunpack.c.l.b16 %v90
  %v159 = vunpack.c.l.b16 %v91
  %v160 = vunpack.c.l.b16 %v92
  %v161 = vunpack.c.l.b16 %v93
  %v162 = vunpack.c.l.b16 %v94
  %v163 = vunpack.c.l.b16 %v95
  %v164 = vunpack.c.l.b16 %v96
  %v165 = vunpack.c.l.b16 %v97
  %v166 = vunpack.c.l.b16 %v98
  %v167 = vunpack.c.l.b16 %v99
  %v168 = vunpack.c.l.b16 %v100
  %v169 = vunpack.c.l.b16 %v101
  %v170 = vunpack.c.l.b16 %v102
  %v171 = vunpack.c.l.b16 %v103
  %v172 = vunpack.c.l.b16 %v104
  %v173 = vunpack.c.l.b16 %v105
  %v174 = vunpack.c.l.b16 %v106
  %v175 = vunpack.c.l.b16 %v107
  %v176 = vunpack.c.l.b16 %v108
  %v177 = vunpack.c.l.b16 %v109
  %v178 = vunpack.c.l.b16 %v110
  %v179 = vunpack.c.l.b16 %v111
  %v180 = vunpack.c.l.b16 %v112
  %v181 = vpack.c.b16 %v150, %v149
  %v182 = vpack.c.b16 %v152, %v151
  %v183 = vpack.c.b16 %v154, %v153
  %v184 = vpack.c.b16 %v156, %v155
  %v185 = vpack.c.b16 %v158, %v157
  %v186 = vpack.c.b16 %v160, %v159
  %v187 = vpack.c.b16 %v162, %v161
  %v188 = vpack.c.b16 %v164, %v163
  %v189 = vpack.c.b16 %v166, %v165
  %v190 = vpack.c.b16 %v168, %v167
  %v191 = vpack.c.b16 %v170, %v169
  %v192 = vpack.c.b16 %v172, %v171
  %v193 = vpack.c.b16 %v174, %v173
  %v194 = vpack.c.b16 %v176, %v175
  %v195 = vpack.c.b16 %v178, %v177
  %v196 = vpack.c.b16 %v180, %v179
  %v201 = vunpack.c.l.b16 %v113
  %v202 = vunpack.c.l.b16 %v114
  %v203 = vunpack.c.l.b16 %v115
  %v204 = vunpack.c.l.b16 %v116
  %v205 = vpack.c.b16 %v202, %v201
  %v206 = vpack.c.b16 %v204, %v203
  %vm209 = vcmask 261120
  %v211 = vsel %vm209, %v181, 0
  %v214 = vsel %vm209, %v182, 0
  %v217 = vsel %vm209, %v183, 0
  %v220 = vsel %vm209, %v184, 0
  %v223 = vsel %vm209, %v185, 0
  %v226 = vsel %vm209, %v186, 0
  %v229 = vsel %vm209, %v187, 0
  %v232 = vsel %vm209, %v188, 0
  %v235 = vsel %vm209, %v189, 0
  %v238 = vsel %vm209, %v190, 0
  %v241 = vsel %vm209, %v191, 0
  %v244 = vsel %vm209, %v192, 0
  %v247 = vsel %vm209, %v193, 0
  %v250 = vsel %vm209, %v194, 0
  %v253 = vsel %vm209, %v195, 0
  %v256 = vsel %vm209, %v196, 0
  %258 = vmatpush.bf16.msra.mxu0 0
  %259 = vmatpush.bf16.msra.mxu0 0
  %260 = vmatpush.bf16.msra.mxu0 0
  %261 = vmatpush.bf16.msra.mxu0 0
  %262 = vmatpush.bf16.msra.mxu0 0
  %263 = vmatpush.bf16.msra.mxu0 0
  %264 = vmatpush.bf16.msra.mxu0 %v206
  %265 = vmatpush.bf16.msra.mxu0 %v205
  %266 = vmatmul.bf16.gmra.mxu0 %v211
  %v267 = vpop.f32.mrf.mxu0
  %v268 = vadd.f32 0.0, %v267
  %v269 = vpop.f32.mrf.mxu0
  %v270 = vadd.f32 0.0, %v269
  %271 = vmatmul.bf16.gmra.mxu0 %v214
  %v272 = vpop.f32.mrf.mxu0
  %v273 = vadd.f32 0.0, %v272
  %v274 = vpop.f32.mrf.mxu0
  %v275 = vadd.f32 0.0, %v274
  %276 = vmatmul.bf16.gmra.mxu0 %v217
  %v277 = vpop.f32.mrf.mxu0
  %v278 = vadd.f32 0.0, %v277
  %v279 = vpop.f32.mrf.mxu0
  %v280 = vadd.f32 0.0, %v279
  %281 = vmatmul.bf16.gmra.mxu0 %v220
  %v282 = vpop.f32.mrf.mxu0
  %v283 = vadd.f32 0.0, %v282
  %v284 = vpop.f32.mrf.mxu0
  %v285 = vadd.f32 0.0, %v284
  %286 = vmatmul.bf16.gmra.mxu0 %v223
  %v287 = vpop.f32.mrf.mxu0
  %v288 = vadd.f32 0.0, %v287
  %v289 = vpop.f32.mrf.mxu0
  %v290 = vadd.f32 0.0, %v289
  %291 = vmatmul.bf16.gmra.mxu0 %v226
  %v292 = vpop.f32.mrf.mxu0
  %v293 = vadd.f32 0.0, %v292
  %v294 = vpop.f32.mrf.mxu0
  %v295 = vadd.f32 0.0, %v294
  %296 = vmatmul.bf16.gmra.mxu0 %v229
  %v297 = vpop.f32.mrf.mxu0
  %v298 = vadd.f32 0.0, %v297
  %v299 = vpop.f32.mrf.mxu0
  %v300 = vadd.f32 0.0, %v299
  %301 = vmatmul.bf16.gmra.mxu0 %v232
  %v302 = vpop.f32.mrf.mxu0
  %v303 = vadd.f32 0.0, %v302
  %v304 = vpop.f32.mrf.mxu0
  %v305 = vadd.f32 0.0, %v304
  %306 = vmatmul.bf16.gmra.mxu0 %v235
  %v307 = vpop.f32.mrf.mxu0
  %v308 = vadd.f32 0.0, %v307
  %v309 = vpop.f32.mrf.mxu0
  %v310 = vadd.f32 0.0, %v309
  %311 = vmatmul.bf16.gmra.mxu0 %v238
  %v312 = vpop.f32.mrf.mxu0
  %v313 = vadd.f32 0.0, %v312
  %v314 = vpop.f32.mrf.mxu0
  %v315 = vadd.f32 0.0, %v314
  %316 = vmatmul.bf16.gmra.mxu0 %v241
  %v317 = vpop.f32.mrf.mxu0
  %v318 = vadd.f32 0.0, %v317
  %v319 = vpop.f32.mrf.mxu0
  %v320 = vadd.f32 0.0, %v319
  %321 = vmatmul.bf16.gmra.mxu0 %v244
  %v322 = vpop.f32.mrf.mxu0
  %v323 = vadd.f32 0.0, %v322
  %v324 = vpop.f32.mrf.mxu0
  %v325 = vadd.f32 0.0, %v324
  %326 = vmatmul.bf16.gmra.mxu0 %v247
  %v327 = vpop.f32.mrf.mxu0
  %v328 = vadd.f32 0.0, %v327
  %v329 = vpop.f32.mrf.mxu0
  %v330 = vadd.f32 0.0, %v329
  %331 = vmatmul.bf16.gmra.mxu0 %v250
  %v332 = vpop.f32.mrf.mxu0
  %v333 = vadd.f32 0.0, %v332
  %v334 = vpop.f32.mrf.mxu0
  %v335 = vadd.f32 0.0, %v334
  %336 = vmatmul.bf16.gmra.mxu0 %v253
  %v337 = vpop.f32.mrf.mxu0
  %v338 = vadd.f32 0.0, %v337
  %v339 = vpop.f32.mrf.mxu0
  %v340 = vadd.f32 0.0, %v339
  %341 = vmatmul.bf16.gmra.mxu0 %v256
  %v342 = vpop.f32.mrf.mxu0
  %v343 = vadd.f32 0.0, %v342
  %v344 = vpop.f32.mrf.mxu0
  %v345 = vadd.f32 0.0, %v344
  %346 = vdwg.mxu0
  %v379 = vunpack.c.l.b16 %v45
  %v380 = vunpack.c.l.b16 %v46
  %v381 = vunpack.c.l.b16 %v47
  %v382 = vunpack.c.l.b16 %v48
  %v383 = vunpack.c.l.b16 %v49
  %v384 = vunpack.c.l.b16 %v50
  %v385 = vunpack.c.l.b16 %v51
  %v386 = vunpack.c.l.b16 %v52
  %v387 = vunpack.c.l.b16 %v53
  %v388 = vunpack.c.l.b16 %v54
  %v389 = vunpack.c.l.b16 %v55
  %v390 = vunpack.c.l.b16 %v56
  %v391 = vunpack.c.l.b16 %v57
  %v392 = vunpack.c.l.b16 %v58
  %v393 = vunpack.c.l.b16 %v59
  %v394 = vunpack.c.l.b16 %v60
  %v395 = vunpack.c.l.b16 %v61
  %v396 = vunpack.c.l.b16 %v62
  %v397 = vunpack.c.l.b16 %v63
  %v398 = vunpack.c.l.b16 %v64
  %v399 = vunpack.c.l.b16 %v65
  %v400 = vunpack.c.l.b16 %v66
  %v401 = vunpack.c.l.b16 %v67
  %v402 = vunpack.c.l.b16 %v68
  %v403 = vunpack.c.l.b16 %v69
  %v404 = vunpack.c.l.b16 %v70
  %v405 = vunpack.c.l.b16 %v71
  %v406 = vunpack.c.l.b16 %v72
  %v407 = vunpack.c.l.b16 %v73
  %v408 = vunpack.c.l.b16 %v74
  %v409 = vunpack.c.l.b16 %v75
  %v410 = vunpack.c.l.b16 %v76
  %v411 = vpack.c.b16 %v380, %v379
  %v412 = vpack.c.b16 %v382, %v381
  %v413 = vpack.c.b16 %v384, %v383
  %v414 = vpack.c.b16 %v386, %v385
  %v415 = vpack.c.b16 %v388, %v387
  %v416 = vpack.c.b16 %v390, %v389
  %v417 = vpack.c.b16 %v392, %v391
  %v418 = vpack.c.b16 %v394, %v393
  %v419 = vpack.c.b16 %v396, %v395
  %v420 = vpack.c.b16 %v398, %v397
  %v421 = vpack.c.b16 %v400, %v399
  %v422 = vpack.c.b16 %v402, %v401
  %v423 = vpack.c.b16 %v404, %v403
  %v424 = vpack.c.b16 %v406, %v405
  %v425 = vpack.c.b16 %v408, %v407
  %v426 = vpack.c.b16 %v410, %v409
  %v431 = vunpack.c.l.b16 %v77
  %v432 = vunpack.c.l.b16 %v78
  %v433 = vunpack.c.l.b16 %v79
  %v434 = vunpack.c.l.b16 %v80
  %v435 = vpack.c.b16 %v432, %v431
  %v436 = vpack.c.b16 %v434, %v433
  %v440 = vsel %vm209, %v411, 0
  %v443 = vsel %vm209, %v412, 0
  %v446 = vsel %vm209, %v413, 0
  %v449 = vsel %vm209, %v414, 0
  %v452 = vsel %vm209, %v415, 0
  %v455 = vsel %vm209, %v416, 0
  %v458 = vsel %vm209, %v417, 0
  %v461 = vsel %vm209, %v418, 0
  %v464 = vsel %vm209, %v419, 0
  %v467 = vsel %vm209, %v420, 0
  %v470 = vsel %vm209, %v421, 0
  %v473 = vsel %vm209, %v422, 0
  %v476 = vsel %vm209, %v423, 0
  %v479 = vsel %vm209, %v424, 0
  %v482 = vsel %vm209, %v425, 0
  %v485 = vsel %vm209, %v426, 0
  %487 = vmatpush.bf16.msra.mxu0 0
  %488 = vmatpush.bf16.msra.mxu0 0
  %489 = vmatpush.bf16.msra.mxu0 0
  %490 = vmatpush.bf16.msra.mxu0 0
  %491 = vmatpush.bf16.msra.mxu0 0
  %492 = vmatpush.bf16.msra.mxu0 0
  %493 = vmatpush.bf16.msra.mxu0 %v436
  %494 = vmatpush.bf16.msra.mxu0 %v435
  %495 = vmatmul.bf16.gmra.mxu0 %v440
  %v496 = vpop.f32.mrf.mxu0
  %v497 = vadd.f32 %v268, %v496
  %v498 = vpop.f32.mrf.mxu0
  %v499 = vadd.f32 %v270, %v498
  %500 = vmatmul.bf16.gmra.mxu0 %v443
  %v501 = vpop.f32.mrf.mxu0
  %v502 = vadd.f32 %v273, %v501
  %v503 = vpop.f32.mrf.mxu0
  %v504 = vadd.f32 %v275, %v503
  %505 = vmatmul.bf16.gmra.mxu0 %v446
  %v506 = vpop.f32.mrf.mxu0
  %v507 = vadd.f32 %v278, %v506
  %v508 = vpop.f32.mrf.mxu0
  %v509 = vadd.f32 %v280, %v508
  %510 = vmatmul.bf16.gmra.mxu0 %v449
  %v511 = vpop.f32.mrf.mxu0
  %v512 = vadd.f32 %v283, %v511
  %v513 = vpop.f32.mrf.mxu0
  %v514 = vadd.f32 %v285, %v513
  %515 = vmatmul.bf16.gmra.mxu0 %v452
  %v516 = vpop.f32.mrf.mxu0
  %v517 = vadd.f32 %v288, %v516
  %v518 = vpop.f32.mrf.mxu0
  %v519 = vadd.f32 %v290, %v518
  %520 = vmatmul.bf16.gmra.mxu0 %v455
  %v521 = vpop.f32.mrf.mxu0
  %v522 = vadd.f32 %v293, %v521
  %v523 = vpop.f32.mrf.mxu0
  %v524 = vadd.f32 %v295, %v523
  %525 = vmatmul.bf16.gmra.mxu0 %v458
  %v526 = vpop.f32.mrf.mxu0
  %v527 = vadd.f32 %v298, %v526
  %v528 = vpop.f32.mrf.mxu0
  %v529 = vadd.f32 %v300, %v528
  %530 = vmatmul.bf16.gmra.mxu0 %v461
  %v531 = vpop.f32.mrf.mxu0
  %v532 = vadd.f32 %v303, %v531
  %v533 = vpop.f32.mrf.mxu0
  %v534 = vadd.f32 %v305, %v533
  %535 = vmatmul.bf16.gmra.mxu0 %v464
  %v536 = vpop.f32.mrf.mxu0
  %v537 = vadd.f32 %v308, %v536
  %v538 = vpop.f32.mrf.mxu0
  %v539 = vadd.f32 %v310, %v538
  %540 = vmatmul.bf16.gmra.mxu0 %v467
  %v541 = vpop.f32.mrf.mxu0
  %v542 = vadd.f32 %v313, %v541
  %v543 = vpop.f32.mrf.mxu0
  %v544 = vadd.f32 %v315, %v543
  %545 = vmatmul.bf16.gmra.mxu0 %v470
  %v546 = vpop.f32.mrf.mxu0
  %v547 = vadd.f32 %v318, %v546
  %v548 = vpop.f32.mrf.mxu0
  %v549 = vadd.f32 %v320, %v548
  %550 = vmatmul.bf16.gmra.mxu0 %v473
  %v551 = vpop.f32.mrf.mxu0
  %v552 = vadd.f32 %v323, %v551
  %v553 = vpop.f32.mrf.mxu0
  %v554 = vadd.f32 %v325, %v553
  %555 = vmatmul.bf16.gmra.mxu0 %v476
  %v556 = vpop.f32.mrf.mxu0
  %v557 = vadd.f32 %v328, %v556
  %v558 = vpop.f32.mrf.mxu0
  %v559 = vadd.f32 %v330, %v558
  %560 = vmatmul.bf16.gmra.mxu0 %v479
  %v561 = vpop.f32.mrf.mxu0
  %v562 = vadd.f32 %v333, %v561
  %v563 = vpop.f32.mrf.mxu0
  %v564 = vadd.f32 %v335, %v563
  %565 = vmatmul.bf16.gmra.mxu0 %v482
  %v566 = vpop.f32.mrf.mxu0
  %v567 = vadd.f32 %v338, %v566
  %v568 = vpop.f32.mrf.mxu0
  %v569 = vadd.f32 %v340, %v568
  %570 = vmatmul.bf16.gmra.mxu0 %v485
  %v571 = vpop.f32.mrf.mxu0
  %v572 = vadd.f32 %v343, %v571
  %v573 = vpop.f32.mrf.mxu0
  %v574 = vadd.f32 %v345, %v573
  %575 = vdwg.mxu0
  %v576 = vld [vmem:[%s6] sm:$0x1]
  %v578 = vperm.slane %v576, 0
  %v580 = vadd.f32 %v497, %v578
  %v581 = vadd.f32 %v499, %v578
  %v582 = vadd.f32 %v502, %v578
  %v583 = vadd.f32 %v504, %v578
  %v584 = vadd.f32 %v507, %v578
  %v585 = vadd.f32 %v509, %v578
  %v586 = vadd.f32 %v512, %v578
  %v587 = vadd.f32 %v514, %v578
  %v588 = vadd.f32 %v517, %v578
  %v589 = vadd.f32 %v519, %v578
  %v590 = vadd.f32 %v522, %v578
  %v591 = vadd.f32 %v524, %v578
  %v592 = vadd.f32 %v527, %v578
  %v593 = vadd.f32 %v529, %v578
  %v594 = vadd.f32 %v532, %v578
  %v595 = vadd.f32 %v534, %v578
  %v596 = vadd.f32 %v537, %v578
  %v597 = vadd.f32 %v539, %v578
  %v598 = vadd.f32 %v542, %v578
  %v599 = vadd.f32 %v544, %v578
  %v600 = vadd.f32 %v547, %v578
  %v601 = vadd.f32 %v549, %v578
  %v602 = vadd.f32 %v552, %v578
  %v603 = vadd.f32 %v554, %v578
  %v604 = vadd.f32 %v557, %v578
  %v605 = vadd.f32 %v559, %v578
  %v606 = vadd.f32 %v562, %v578
  %v607 = vadd.f32 %v564, %v578
  %v608 = vadd.f32 %v567, %v578
  %v609 = vadd.f32 %v569, %v578
  %v610 = vadd.f32 %v572, %v578
  %v611 = vadd.f32 %v574, %v578
  %v612 = vmax.f32 %v580, 0.0
  %v613 = vmax.f32 %v581, 0.0
  %v614 = vmax.f32 %v582, 0.0
  %v615 = vmax.f32 %v583, 0.0
  %v616 = vmax.f32 %v584, 0.0
  %v617 = vmax.f32 %v585, 0.0
  %v618 = vmax.f32 %v586, 0.0
  %v619 = vmax.f32 %v587, 0.0
  %v620 = vmax.f32 %v588, 0.0
  %v621 = vmax.f32 %v589, 0.0
  %v622 = vmax.f32 %v590, 0.0
  %v623 = vmax.f32 %v591, 0.0
  %v624 = vmax.f32 %v592, 0.0
  %v625 = vmax.f32 %v593, 0.0
  %v626 = vmax.f32 %v594, 0.0
  %v627 = vmax.f32 %v595, 0.0
  %v628 = vmax.f32 %v596, 0.0
  %v629 = vmax.f32 %v597, 0.0
  %v630 = vmax.f32 %v598, 0.0
  %v631 = vmax.f32 %v599, 0.0
  %v632 = vmax.f32 %v600, 0.0
  %v633 = vmax.f32 %v601, 0.0
  %v634 = vmax.f32 %v602, 0.0
  %v635 = vmax.f32 %v603, 0.0
  %v636 = vmax.f32 %v604, 0.0
  %v637 = vmax.f32 %v605, 0.0
  %v638 = vmax.f32 %v606, 0.0
  %v639 = vmax.f32 %v607, 0.0
  %v640 = vmax.f32 %v608, 0.0
  %v641 = vmax.f32 %v609, 0.0
  %v642 = vmax.f32 %v610, 0.0
  %v643 = vmax.f32 %v611, 0.0
  %v644 = vld [vmem:[%s3] sm:$0xff]
  %v645 = vld [vmem:[%s3 + $0x8] sm:$0xff]
  %v646 = vld [vmem:[%s3 + $0x10] sm:$0xff]
  %v647 = vld [vmem:[%s3 + $0x18] sm:$0xff]
  %v648 = vpack.c.bf16 %v613, %v612
  %v649 = vpack.c.bf16 %v615, %v614
  %v650 = vpack.c.bf16 %v617, %v616
  %v651 = vpack.c.bf16 %v619, %v618
  %v652 = vpack.c.bf16 %v621, %v620
  %v653 = vpack.c.bf16 %v623, %v622
  %v654 = vpack.c.bf16 %v625, %v624
  %v655 = vpack.c.bf16 %v627, %v626
  %v656 = vpack.c.bf16 %v629, %v628
  %v657 = vpack.c.bf16 %v631, %v630
  %v658 = vpack.c.bf16 %v633, %v632
  %v659 = vpack.c.bf16 %v635, %v634
  %v660 = vpack.c.bf16 %v637, %v636
  %v661 = vpack.c.bf16 %v639, %v638
  %v662 = vpack.c.bf16 %v641, %v640
  %v663 = vpack.c.bf16 %v643, %v642
  %v668 = vunpack.c.l.b16 %v644
  %v669 = vunpack.c.h.b16 %v644
  %v670 = vunpack.c.l.b16 %v645
  %v671 = vunpack.c.h.b16 %v645
  %v672 = vunpack.c.l.b16 %v646
  %v673 = vunpack.c.h.b16 %v646
  %v674 = vunpack.c.l.b16 %v647
  %v675 = vunpack.c.h.b16 %v647
  %v676 = vpack.c.b16 %v670, %v668
  %v677 = vpack.c.b16 %v671, %v669
  %v678 = vpack.c.b16 %v674, %v672
  %v679 = vpack.c.b16 %v675, %v673
  %684 = vmatpush.bf16.msra.mxu0 %v655
  %685 = vmatpush.bf16.msra.mxu0 %v654
  %686 = vmatpush.bf16.msra.mxu0 %v653
  %687 = vmatpush.bf16.msra.mxu0 %v652
  %688 = vmatpush.bf16.msra.mxu0 %v651
  %689 = vmatpush.bf16.msra.mxu0 %v650
  %690 = vmatpush.bf16.msra.mxu0 %v649
  %691 = vmatpush.bf16.msra.mxu0 %v648
  %692 = vmatmul.bf16.gmra.mxu0 %v676
  %v693 = vpop.f32.mrf.mxu0
  %v694 = vadd.f32 0.0, %v693
  %v695 = vpop.f32.mrf.mxu0
  %v696 = vadd.f32 0.0, %v695
  %697 = vmatmul.bf16.gmra.mxu0 %v678
  %v698 = vpop.f32.mrf.mxu0
  %v699 = vadd.f32 0.0, %v698
  %v700 = vpop.f32.mrf.mxu0
  %v701 = vadd.f32 0.0, %v700
  %702 = vdwg.mxu0
  %703 = vmatpush.bf16.msra.mxu0 %v663
  %704 = vmatpush.bf16.msra.mxu0 %v662
  %705 = vmatpush.bf16.msra.mxu0 %v661
  %706 = vmatpush.bf16.msra.mxu0 %v660
  %707 = vmatpush.bf16.msra.mxu0 %v659
  %708 = vmatpush.bf16.msra.mxu0 %v658
  %709 = vmatpush.bf16.msra.mxu0 %v657
  %710 = vmatpush.bf16.msra.mxu0 %v656
  %711 = vmatmul.bf16.gmra.mxu0 %v677
  %v712 = vpop.f32.mrf.mxu0
  %v713 = vadd.f32 %v694, %v712
  %v714 = vpop.f32.mrf.mxu0
  %v715 = vadd.f32 %v696, %v714
  %716 = vmatmul.bf16.gmra.mxu0 %v679
  %v717 = vpop.f32.mrf.mxu0
  %v718 = vadd.f32 %v699, %v717
  %v719 = vpop.f32.mrf.mxu0
  %v720 = vadd.f32 %v701, %v719
  %721 = vdwg.mxu0
  %v722 = vld [vmem:[%s2] sm:$0xff]
  %v723 = vld [vmem:[%s2 + $0x8] sm:$0xff]
  %v724 = vld [vmem:[%s2 + $0x10] sm:$0xff]
  %v725 = vld [vmem:[%s2 + $0x18] sm:$0xff]
  %v726 = vadd.f32 %v722, %v713
  %v727 = vadd.f32 %v723, %v715
  %v728 = vadd.f32 %v724, %v718
  %v729 = vadd.f32 %v725, %v720
  %v730 = vpack.c.bf16 %v727, %v726
  %v731 = vpack.c.bf16 %v729, %v728
  %v732 = vld [vmem:[%s7] sm:$0xf]
  %v733 = vld [vmem:[%s7 + $0x4] sm:$0xf]
  %v734 = vld [vmem:[%s7 + $0x8] sm:$0xf]
  %v735 = vld [vmem:[%s7 + $0xc] sm:$0xf]
  %v736 = vld [vmem:[%s8] sm:$0x1]
  %v738 = vperm.slane %v736, 0
  %v744 = vunpack.c.l.b16 %v732
  %v745 = vunpack.c.l.b16 %v733
  %v746 = vunpack.c.l.b16 %v734
  %v747 = vunpack.c.l.b16 %v735
  %v748 = vpack.c.b16 %v745, %v744
  %v749 = vpack.c.b16 %v747, %v746
  %v753 = vsel %vm209, %v730, 0
  %v756 = vsel %vm209, %v731, 0
  %758 = vmatpush.bf16.msra.mxu0 0
  %759 = vmatpush.bf16.msra.mxu0 0
  %760 = vmatpush.bf16.msra.mxu0 0
  %761 = vmatpush.bf16.msra.mxu0 0
  %762 = vmatpush.bf16.msra.mxu0 0
  %763 = vmatpush.bf16.msra.mxu0 0
  %764 = vmatpush.bf16.msra.mxu0 %v749
  %765 = vmatpush.bf16.msra.mxu0 %v748
  %766 = vmatmul.bf16.gmra.mxu0 %v753
  %v767 = vpop.f32.mrf.mxu0
  %v768 = vadd.f32 %v738, %v767
  %v769 = vpop.f32.mrf.mxu0
  %v770 = vadd.f32 %v738, %v769
  %771 = vmatmul.bf16.gmra.mxu0 %v756
  %v772 = vpop.f32.mrf.mxu0
  %v773 = vadd.f32 %v738, %v772
  %v774 = vpop.f32.mrf.mxu0
  %v775 = vadd.f32 %v738, %v774
  %776 = vdwg.mxu0
  %v777 = vmax.f32 %v768, 0.0
  %v778 = vmax.f32 %v770, 0.0
  %v779 = vmax.f32 %v773, 0.0
  %v780 = vmax.f32 %v775, 0.0
  %v781 = vpack.c.bf16 %v778, %v777
  %v782 = vpack.c.bf16 %v780, %v779
  %v783 = vld [vmem:[%s9] sm:$0xf]
  %v784 = vld [vmem:[%s9 + $0x4] sm:$0xf]
  %v785 = vld [vmem:[%s9 + $0x8] sm:$0xf]
  %v786 = vld [vmem:[%s9 + $0xc] sm:$0xf]
  %v787 = vld [vmem:[%s9 + $0x10] sm:$0xf]
  %v788 = vld [vmem:[%s9 + $0x14] sm:$0xf]
  %v789 = vld [vmem:[%s9 + $0x18] sm:$0xf]
  %v790 = vld [vmem:[%s9 + $0x1c] sm:$0xf]
  %v791 = vld [vmem:[%s9 + $0x20] sm:$0xf]
  %v792 = vld [vmem:[%s9 + $0x24] sm:$0xf]
  %v793 = vld [vmem:[%s9 + $0x28] sm:$0xf]
  %v794 = vld [vmem:[%s9 + $0x2c] sm:$0xf]
  %v795 = vld [vmem:[%s9 + $0x30] sm:$0xf]
  %v796 = vld [vmem:[%s9 + $0x34] sm:$0xf]
  %v797 = vld [vmem:[%s9 + $0x38] sm:$0xf]
  %v798 = vld [vmem:[%s9 + $0x3c] sm:$0xf]
  %v799 = vld [vmem:[%s10] sm:$0x1]
  %v801 = vperm.slane %v799, 0
  %v819 = vunpack.c.l.b16 %v783
  %v820 = vunpack.c.l.b16 %v784
  %v821 = vunpack.c.l.b16 %v785
  %v822 = vunpack.c.l.b16 %v786
  %v823 = vunpack.c.l.b16 %v787
  %v824 = vunpack.c.l.b16 %v788
  %v825 = vunpack.c.l.b16 %v789
  %v826 = vunpack.c.l.b16 %v790
  %v827 = vunpack.c.l.b16 %v791
  %v828 = vunpack.c.l.b16 %v792
  %v829 = vunpack.c.l.b16 %v793
  %v830 = vunpack.c.l.b16 %v794
  %v831 = vunpack.c.l.b16 %v795
  %v832 = vunpack.c.l.b16 %v796
  %v833 = vunpack.c.l.b16 %v797
  %v834 = vunpack.c.l.b16 %v798
  %v835 = vpack.c.b16 %v820, %v819
  %v836 = vpack.c.b16 %v822, %v821
  %v837 = vpack.c.b16 %v824, %v823
  %v838 = vpack.c.b16 %v826, %v825
  %v839 = vpack.c.b16 %v828, %v827
  %v840 = vpack.c.b16 %v830, %v829
  %v841 = vpack.c.b16 %v832, %v831
  %v842 = vpack.c.b16 %v834, %v833
  %851 = vmatpush.bf16.msra.mxu0 %v842
  %852 = vmatpush.bf16.msra.mxu0 %v841
  %853 = vmatpush.bf16.msra.mxu0 %v840
  %854 = vmatpush.bf16.msra.mxu0 %v839
  %855 = vmatpush.bf16.msra.mxu0 %v838
  %856 = vmatpush.bf16.msra.mxu0 %v837
  %857 = vmatpush.bf16.msra.mxu0 %v836
  %858 = vmatpush.bf16.msra.mxu0 %v835
  %859 = vmatmul.bf16.gmra.mxu0 %v781
  %v860 = vpop.f32.mrf.mxu0
  %v861 = vadd.f32 %v801, %v860
  %v862 = vpop.f32.mrf.mxu0
  %v863 = vadd.f32 %v801, %v862
  %864 = vmatmul.bf16.gmra.mxu0 %v782
  %v865 = vpop.f32.mrf.mxu0
  %v866 = vadd.f32 %v801, %v865
  %v867 = vpop.f32.mrf.mxu0
  %v868 = vadd.f32 %v801, %v867
  %869 = vdwg.mxu0
  %v870 = vmax.f32 %v861, 0.0
  %v871 = vmax.f32 %v863, 0.0
  %v872 = vmax.f32 %v866, 0.0
  %v873 = vmax.f32 %v868, 0.0
  %v874 = vpack.c.bf16 %v871, %v870
  %v875 = vpack.c.bf16 %v873, %v872
  %v876 = vld [vmem:[%s11] sm:$0xf]
  %v877 = vld [vmem:[%s11 + $0x4] sm:$0xf]
  %v878 = vld [vmem:[%s11 + $0x8] sm:$0xf]
  %v879 = vld [vmem:[%s11 + $0xc] sm:$0xf]
  %v880 = vld [vmem:[%s11 + $0x10] sm:$0xf]
  %v881 = vld [vmem:[%s11 + $0x14] sm:$0xf]
  %v882 = vld [vmem:[%s11 + $0x18] sm:$0xf]
  %v883 = vld [vmem:[%s11 + $0x1c] sm:$0xf]
  %v884 = vld [vmem:[%s11 + $0x20] sm:$0xf]
  %v885 = vld [vmem:[%s11 + $0x24] sm:$0xf]
  %v886 = vld [vmem:[%s11 + $0x28] sm:$0xf]
  %v887 = vld [vmem:[%s11 + $0x2c] sm:$0xf]
  %v888 = vld [vmem:[%s11 + $0x30] sm:$0xf]
  %v889 = vld [vmem:[%s11 + $0x34] sm:$0xf]
  %v890 = vld [vmem:[%s11 + $0x38] sm:$0xf]
  %v891 = vld [vmem:[%s11 + $0x3c] sm:$0xf]
  %v892 = vld [vmem:[%s12] sm:$0x1]
  %v894 = vperm.slane %v892, 0
  %v912 = vunpack.c.l.b16 %v876
  %v913 = vunpack.c.l.b16 %v877
  %v914 = vunpack.c.l.b16 %v878
  %v915 = vunpack.c.l.b16 %v879
  %v916 = vunpack.c.l.b16 %v880
  %v917 = vunpack.c.l.b16 %v881
  %v918 = vunpack.c.l.b16 %v882
  %v919 = vunpack.c.l.b16 %v883
  %v920 = vunpack.c.l.b16 %v884
  %v921 = vunpack.c.l.b16 %v885
  %v922 = vunpack.c.l.b16 %v886
  %v923 = vunpack.c.l.b16 %v887
  %v924 = vunpack.c.l.b16 %v888
  %v925 = vunpack.c.l.b16 %v889
  %v926 = vunpack.c.l.b16 %v890
  %v927 = vunpack.c.l.b16 %v891
  %v928 = vpack.c.b16 %v913, %v912
  %v929 = vpack.c.b16 %v915, %v914
  %v930 = vpack.c.b16 %v917, %v916
  %v931 = vpack.c.b16 %v919, %v918
  %v932 = vpack.c.b16 %v921, %v920
  %v933 = vpack.c.b16 %v923, %v922
  %v934 = vpack.c.b16 %v925, %v924
  %v935 = vpack.c.b16 %v927, %v926
  %944 = vmatpush.bf16.msra.mxu0 %v935
  %945 = vmatpush.bf16.msra.mxu0 %v934
  %946 = vmatpush.bf16.msra.mxu0 %v933
  %947 = vmatpush.bf16.msra.mxu0 %v932
  %948 = vmatpush.bf16.msra.mxu0 %v931
  %949 = vmatpush.bf16.msra.mxu0 %v930
  %950 = vmatpush.bf16.msra.mxu0 %v929
  %951 = vmatpush.bf16.msra.mxu0 %v928
  %952 = vmatmul.bf16.gmra.mxu0 %v874
  %v953 = vpop.f32.mrf.mxu0
  %v954 = vadd.f32 %v894, %v953
  %v955 = vpop.f32.mrf.mxu0
  %v956 = vadd.f32 %v894, %v955
  %957 = vmatmul.bf16.gmra.mxu0 %v875
  %v958 = vpop.f32.mrf.mxu0
  %v959 = vadd.f32 %v894, %v958
  %v960 = vpop.f32.mrf.mxu0
  %v961 = vadd.f32 %v894, %v960
  %962 = vdwg.mxu0
  %v963 = vadd.f32 %v726, %v954
  %v964 = vadd.f32 %v727, %v956
  %v965 = vadd.f32 %v728, %v959
  %v966 = vadd.f32 %v729, %v961
  %967 = vst.msk [vmem:[%s13] sm:$0xff] %vm209, %v963
  %968 = vst.msk [vmem:[%s13 + $0x8] sm:$0xff] %vm209, %v964
  %969 = vst.msk [vmem:[%s13 + $0x10] sm:$0xff] %vm209, %v965
  %970 = vst.msk [vmem:[%s13 + $0x18] sm:$0xff] %vm209, %v966
  // Predicated region
  $region54: #{modifier_forward.7} parent=0 // pred_check
    _
  $region55: #{modifier_forward.7} parent=0 // pred_check_branch
    %972 = sbr.rel (0) target = $region57
  $region56: #{modifier_forward.7} parent=0 // pred_region
    _
  $region57: #{modifier_forward.7} parent=0 // pred_fallthru
    _
  // Predicated region
  $region58: #{modifier_forward.7} parent=0 // pred_check
    _
  $region59: #{modifier_forward.7} parent=0 // pred_check_branch
    %974 = sbr.rel (0) target = $region61
  $region60: #{modifier_forward.7} parent=0 // pred_region
    _
  $region61: #{modifier_forward.7} parent=0 // pred_fallthru
    _

</llo_original>
